<compile_context>
chip_gen: v7x
topology: tpu7x:2x2x1
jax: 0.10.0
libtpu: 0.0.40
codegen_flags: <defaults>
</compile_context>

<pallas_src>
import functools

import numpy as np
import jax
import jax.numpy as jnp
from jax import lax
from jax.experimental import pallas as pl
from jax.experimental.pallas import tpu as pltpu


# ----------------------------- shared in-kernel helpers -----------------------------
def _raw_reshape_to_cm(v_cl, vr_ref):
    """Reference quirk: raw `.reshape((N, c, Pq))` of the (N, Pq, c) bmm output (no
    permute).  Route contiguous flat chunks through a VMEM scratch with static slices."""
    N, Pq, c = v_cl.shape
    for p in range(Pq):
        lo, hi = p * c, (p + 1) * c                    # flat range covered by source row p
        for ci in range(lo // Pq, (hi - 1) // Pq + 1):  # target rows it overlaps
            a, b = max(lo, ci * Pq), min(hi, (ci + 1) * Pq)
            vr_ref[:, ci:ci + 1, a - ci * Pq:b - ci * Pq] = v_cl[:, p:p + 1, a - lo:b - lo]
    return vr_ref[...]                                  # (N, c, Pq)


def _phi_tail(v_cl, gq_ref, pool_ref, w1, w2, b_col, o_ref, vr_ref):
    """Shared epilogue: raw reshape, fused adaptive-avg-pool (as matmul), Phi conv + ReLU."""
    f32 = jnp.float32
    N, c, Sg = gq_ref.shape
    Pq = o_ref.shape[2]

    v_q = _raw_reshape_to_cm(v_cl, vr_ref)                                   # (N, c, Pq)

    # adaptive_avg_pool2d(Gq, (hq, wq)) as an NT matmul against the pooling matrix
    gq = gq_ref[...]                                                          # (N, c, Sg)
    pool_b = jnp.broadcast_to(pool_ref[...][None], (N, Pq, Sg))
    gq_p = jnp.einsum('nci,noi->nco', gq, pool_b, preferred_element_type=f32)  # (N, c, Pq)

    # Phi(cat([v_q, Gq], dim=1)) + ReLU, with Phi_w split so no concat is materialized
    w1_b = jnp.broadcast_to(w1[None], (N,) + w1.shape)
    w2_b = jnp.broadcast_to(w2[None], (N,) + w2.shape)
    y = (jnp.einsum('nij,njq->niq', w1_b, v_q, preferred_element_type=f32)
         + jnp.einsum('nij,njq->niq', w2_b, gq_p, preferred_element_type=f32)
         + b_col)
    o_ref[...] = jnp.maximum(y, 0.0).astype(o_ref.dtype)


# ----------------------------- fused GAU kernel (softmax path) ----------------------
def _gau_kernel(fq_ref, fs_ref, gs_ref, gq_ref, pool_ref, w_ref, o_ref, vr_ref):
    f32 = jnp.float32
    N, c, Pq = fq_ref.shape
    B, _, Ss = fs_ref.shape
    shot = B // N

    # resident packed weight slab: rows [phi | theta | Phi_w1 | Phi_w2], last column = bias
    phi_w,   phi_b   = w_ref[0 * c:1 * c, 0:c], w_ref[0 * c:1 * c, c:c + 1]
    theta_w, theta_b = w_ref[1 * c:2 * c, 0:c], w_ref[1 * c:2 * c, c:c + 1]
    Phi_w1,  Phi_b   = w_ref[2 * c:3 * c, 0:c], w_ref[2 * c:3 * c, c:c + 1]
    Phi_w2           = w_ref[3 * c:4 * c, 0:c]

    fq = fq_ref[...]                                   # (N, c, Pq)  raw NCHW (spatial flat)
    fs = fs_ref[...]                                   # (B, c, Ss)
    gs = gs_ref[...]                                   # (B, c, Ss)

    # 1x1 convs, channel-major (weights on the left, batched NN matmuls; NCHW as-is)
    tq_cm = jnp.einsum('nij,njq->niq', jnp.broadcast_to(phi_w[None], (N, c, c)), fq,
                       preferred_element_type=f32) + phi_b                   # (N, c, Pq)
    ts_cm = jnp.einsum('bij,bjs->bis', jnp.broadcast_to(theta_w[None], (B, c, c)), fs,
                       preferred_element_type=f32) + theta_b                 # (B, c, Ss)

    # transpose Tq to channels-last on the MXU (identity NT matmul; MXU has slack here)
    rows = lax.broadcasted_iota(jnp.int32, (Pq, Pq), 0)
    cols = lax.broadcasted_iota(jnp.int32, (Pq, Pq), 1)
    eye_b = jnp.broadcast_to((rows == cols).astype(f32)[None], (N, Pq, Pq))
    tq_cl = jnp.einsum('nqj,ncj->nqc', eye_b, tq_cm, preferred_element_type=f32)  # (N, Pq, c)

    # scores per shot (batched NN contracting channels), softmax over the joint (shot, Ss) axis
    tq_rep = jnp.broadcast_to(tq_cl[:, None], (N, shot, Pq, c)).reshape(B, Pq, c)
    s4 = jnp.einsum('bqc,bcs->bqs', tq_rep, ts_cm,
                    preferred_element_type=f32).reshape(N, shot, Pq, Ss)
    m = jnp.max(jnp.max(s4, axis=-1, keepdims=True), axis=1, keepdims=True)   # (N,1,Pq,1)
    p4 = jnp.exp(s4 - m)
    l = jnp.sum(jnp.sum(p4, axis=-1, keepdims=True), axis=1, keepdims=True)
    att = p4 * pl.reciprocal(l, approx=True)   # EUP vrcp: ~1e-3 rel tolerance vs exact divide

    # v = att @ Gs (batched NT per shot, summed over shots) -> channels-last (N, Pq, c)
    v_s = jnp.einsum('bqs,bcs->bqc', att.reshape(B, Pq, Ss), gs, preferred_element_type=f32)
    v_cl = jnp.sum(v_s.reshape(N, shot, Pq, c), axis=1)

    _phi_tail(v_cl, gq_ref, pool_ref, Phi_w1, Phi_w2, Phi_b, o_ref, vr_ref)


# ----------------------------- fused GAU kernel (equal_weight path) -----------------
def _gau_eq_kernel(gs_ref, gq_ref, pool_ref, w_ref, o_ref, vr_ref, *, inv_hw):
    # att.data.fill_(1/(hs*ws)): every query row gets the same weighted sum of Gs, so the
    # scores/softmax/att@Gs matmuls and the Fq/Fs/phi/theta inputs are skipped entirely.
    N, c, _ = gq_ref.shape
    B, _, Ss = gs_ref.shape
    shot = B // N
    Pq = o_ref.shape[2]

    Phi_w1, Phi_b = w_ref[0:c, 0:c], w_ref[0:c, c:c + 1]
    Phi_w2 = w_ref[c:2 * c, 0:c]

    gs4 = gs_ref[...].reshape(N, shot, c, Ss)
    gsum = jnp.sum(jnp.sum(gs4, axis=1), axis=-1)                  # (N, c): over shots & pixels
    v_cl = jnp.broadcast_to((inv_hw * gsum)[:, None, :], (N, Pq, c))

    _phi_tail(v_cl, gq_ref, pool_ref, Phi_w1, Phi_w2, Phi_b, o_ref, vr_ref)


# ----------------------------- pallas_call builders ----------------------------------
def _pallas_gau(fq, fs, gs, gq, pool, slab):
    N, c, Pq = fq.shape
    B, _, Ss = fs.shape
    Sg = gq.shape[2]
    return pl.pallas_call(
        _gau_kernel,
        out_shape=jax.ShapeDtypeStruct((N, c, Pq), fq.dtype),
        grid_spec=pltpu.PrefetchScalarGridSpec(
            num_scalar_prefetch=0,
            grid=(1,),                                  # single launch; whole problem fits VMEM
            in_specs=[
                pl.BlockSpec((N, c, Pq), lambda i: (0, 0, 0)),       # Fq  (NCHW, spatial flat)
                pl.BlockSpec((B, c, Ss), lambda i: (0, 0, 0)),       # Fs
                pl.BlockSpec((B, c, Ss), lambda i: (0, 0, 0)),       # Gs
                pl.BlockSpec((N, c, Sg), lambda i: (0, 0, 0)),       # Gq (pre-pool)
                pl.BlockSpec((Pq, Sg), lambda i: (0, 0)),            # pooling matrix
                pl.BlockSpec((4 * c, c + 1), lambda i: (0, 0)),      # packed weight slab
            ],
            out_specs=pl.BlockSpec((N, c, Pq), lambda i: (0, 0, 0)),
            scratch_shapes=[pltpu.VMEM((N, c, Pq), jnp.float32)],    # raw-reshape staging
        ),
        compiler_params=pltpu.CompilerParams(dimension_semantics=("arbitrary",)),
    )(fq, fs, gs, gq, pool, slab)


def _pallas_gau_eq(gs, gq, pool, slab, *, inv_hw):
    B, c, Ss = gs.shape
    N, _, Sg = gq.shape
    Pq = pool.shape[0]
    kernel = functools.partial(_gau_eq_kernel, inv_hw=inv_hw)
    return pl.pallas_call(
        kernel,
        out_shape=jax.ShapeDtypeStruct((N, c, Pq), gs.dtype),
        grid_spec=pltpu.PrefetchScalarGridSpec(
            num_scalar_prefetch=0,
            grid=(1,),
            in_specs=[
                pl.BlockSpec((B, c, Ss), lambda i: (0, 0, 0)),
                pl.BlockSpec((N, c, Sg), lambda i: (0, 0, 0)),
                pl.BlockSpec((Pq, Sg), lambda i: (0, 0)),
                pl.BlockSpec((2 * c, c + 1), lambda i: (0, 0)),
            ],
            out_specs=pl.BlockSpec((N, c, Pq), lambda i: (0, 0, 0)),
            scratch_shapes=[pltpu.VMEM((N, c, Pq), jnp.float32)],
        ),
        compiler_params=pltpu.CompilerParams(dimension_semantics=("arbitrary",)),
    )(gs, gq, pool, slab)


# ----------------------------- wrapper ------------------------------------------------
def _adaptive_pool_matrix(in_h, in_w, out_h, out_w):
    """PyTorch-exact adaptive_avg_pool2d as a (out_h*out_w, in_h*in_w) matrix (np constant)."""
    def mat1d(n_in, n_out):
        m = np.zeros((n_out, n_in), np.float32)
        for o in range(n_out):
            a = (o * n_in) // n_out
            b = -(-((o + 1) * n_in) // n_out)
            m[o, a:b] = 1.0 / (b - a)
        return m
    return jnp.asarray(np.kron(mat1d(in_h, out_h), mat1d(in_w, out_w)))


def _pack_weights(params, equal_weight):
    """One resident slab: rows of [W | bias_column]; Phi_w split into its v_q / Gq halves."""
    c = params["phi_w"].shape[0]

    def blk(w, b):
        return jnp.concatenate([w, b.reshape(c, 1)], axis=1)

    zeros = jnp.zeros((c,), params["Phi_b"].dtype)
    if equal_weight:
        rows = [blk(params["Phi_w"][:, :c], params["Phi_b"]),
                blk(params["Phi_w"][:, c:], zeros)]
    else:
        rows = [blk(params["phi_w"], params["phi_b"]),
                blk(params["theta_w"], params["theta_b"]),
                blk(params["Phi_w"][:, :c], params["Phi_b"]),
                blk(params["Phi_w"][:, c:], zeros)]
    return jnp.concatenate(rows, axis=0)


def gau_forward(params, Fs, Fq, Ys, Gs, Gq, equal_weight=False, eps=1e-08):
    del Ys, eps                                         # unused by the reference forward
    nshot, c, hs, ws = Fs.shape
    N, _, hq, wq = Fq.shape
    hg, wg = Gq.shape[2], Gq.shape[3]
    Pq, Ss, Sg = hq * wq, hs * ws, hg * wg

    # only free contiguous reshapes -- NCHW is consumed directly by the kernel
    gs = Gs.reshape(nshot, c, Ss)                       # shot ordering matches depart_first_dim
    gq = Gq.reshape(N, c, Sg)
    pool = _adaptive_pool_matrix(hg, wg, hq, wq)
    slab = _pack_weights(params, equal_weight)

    if equal_weight:
        out = _pallas_gau_eq(gs, gq, pool, slab, inv_hw=1.0 / (hs * ws))
    else:
        fq = Fq.reshape(N, c, Pq)
        fs = Fs.reshape(nshot, c, Ss)
        out = _pallas_gau(fq, fs, gs, gq, pool, slab)
    return out.reshape(N, c, hq, wq)                    # free contiguous reshape


# ----------------------------- params & pure-JAX reference ---------------------------
def init_params(key, depth):
    ks = jax.random.split(key, 6)

    def conv_init(kw, kb, cout, cin):
        bound = 1.0 / (cin ** 0.5)
        w = jax.random.uniform(kw, (cout, cin), jnp.float32, -bound, bound)
        b = jax.random.uniform(kb, (cout,), jnp.float32, -bound, bound)
        return w, b

    phi_w, phi_b = conv_init(ks[0], ks[1], depth, depth)
    theta_w, theta_b = conv_init(ks[2], ks[3], depth, depth)
    Phi_w, Phi_b = conv_init(ks[4], ks[5], depth, 2 * depth)
    return dict(phi_w=phi_w, phi_b=phi_b, theta_w=theta_w, theta_b=theta_b,
                Phi_w=Phi_w, Phi_b=Phi_b)


def gau_reference(params, Fs, Fq, Ys, Gs, Gq, equal_weight=False):
    """Straight JAX port of the PyTorch forward (for numerical validation)."""
    del Ys
    nshot, c, hs, ws = Fs.shape
    N, _, hq, wq = Fq.shape
    shot = nshot // N

    def conv1x1(x, w, b):
        return jnp.einsum('oc,nchw->nohw', w, x, precision='highest') + b[None, :, None, None]

    Ts = conv1x1(Fs, params["theta_w"], params["theta_b"])
    Tq = conv1x1(Fq, params["phi_w"], params["phi_b"])
    Ts_r = Ts.reshape(N, shot, c, hs, ws).transpose(0, 1, 3, 4, 2).reshape(N, shot * hs * ws, c)
    Tq_r = Tq.transpose(0, 2, 3, 1).reshape(N, hq * wq, c)
    att = jax.nn.softmax(jnp.einsum('nqc,nkc->nqk', Tq_r, Ts_r, precision='highest'), axis=2)
    if equal_weight:
        att = jnp.full_like(att, 1.0 / (hs * ws))
    Gs_r = Gs.reshape(N, shot, c, hs, ws).transpose(0, 1, 3, 4, 2).reshape(N, shot * hs * ws, c)
    v_q = jnp.einsum('nqk,nkc->nqc', att, Gs_r, precision='highest').reshape(N, c, hq, wq)
    hg, wg = Gq.shape[2], Gq.shape[3]
    Gq_p = Gq.reshape(N, c, hq, hg // hq, wq, wg // wq).mean(axis=(3, 5))
    x = jnp.concatenate([v_q, Gq_p], axis=1)
    y = (jnp.einsum('oc,nchw->nohw', params["Phi_w"], x, precision='highest')
         + params["Phi_b"][None, :, None, None])
    return jnp.maximum(y, 0.0)


# ----------------------------- demo ---------------------------------------------------
if __name__ == "__main__":
    depth = 32
    N, shot = 2, 2
    nshot = N * shot
    hs = ws = 4
    hq = wq = 4
    hg = wg = 8                                         # Gq spatial before adaptive pool

    key = jax.random.PRNGKey(0)
    kp, kfs, kfq, kys, kgs, kgq = jax.random.split(key, 6)
    params = init_params(kp, depth)

    Fs = jax.random.normal(kfs, (nshot, depth, hs, ws), jnp.float32)
    Fq = jax.random.normal(kfq, (N, depth, hq, wq), jnp.float32)
    Ys = jax.random.normal(kys, (nshot, 1, hs, ws), jnp.float32)   # unused by forward
    Gs = jax.random.normal(kgs, (nshot, depth, hs, ws), jnp.float32)
    Gq = jax.random.normal(kgq, (N, depth, hg, wg), jnp.float32)

    # softmax-attention path
    fwd = jax.jit(functools.partial(gau_forward, equal_weight=False))
    out = jax.block_until_ready(fwd(params, Fs, Fq, Ys, Gs, Gq))
    assert out.shape == (N, depth, hq, wq), out.shape
    assert bool(jnp.all(jnp.isfinite(out)))
    ref = gau_reference(params, Fs, Fq, Ys, Gs, Gq, equal_weight=False)
    assert bool(jnp.allclose(out, ref, rtol=2e-2, atol=2e-2)), \
        float(jnp.max(jnp.abs(out - ref)))

    # uniform-attention (equal_weight) specialization
    fwd_eq = jax.jit(functools.partial(gau_forward, equal_weight=True))
    out_eq = jax.block_until_ready(fwd_eq(params, Fs, Fq, Ys, Gs, Gq))
    assert out_eq.shape == (N, depth, hq, wq), out_eq.shape
    assert bool(jnp.all(jnp.isfinite(out_eq)))
    ref_eq = gau_reference(params, Fs, Fq, Ys, Gs, Gq, equal_weight=True)
    assert bool(jnp.allclose(out_eq, ref_eq, rtol=2e-2, atol=2e-2)), \
        float(jnp.max(jnp.abs(out_eq - ref_eq)))

    print("KERNEL_OK")
</pallas_src>

<mosaic_0001>
module attributes {stable_mosaic.version = 11 : i64} {
  func.func @_gau_kernel(%arg0: i32, %arg1: memref<2x32x16xf32, #tpu.memory_space<vmem>>, %arg2: memref<4x32x16xf32, #tpu.memory_space<vmem>>, %arg3: memref<4x32x16xf32, #tpu.memory_space<vmem>>, %arg4: memref<2x32x64xf32, #tpu.memory_space<vmem>>, %arg5: memref<16x64xf32, #tpu.memory_space<vmem>>, %arg6: memref<128x33xf32, #tpu.memory_space<vmem>>, %arg7: memref<2x32x16xf32, #tpu.memory_space<vmem>>, %arg8: memref<2x32x16xf32, #tpu.memory_space<vmem>>) attributes {dimension_semantics = [#tpu.dimension_semantics<arbitrary>], iteration_bounds = array<i64: 1>, scalar_prefetch = 0 : i64, scratch_operands = 1 : i64, tpu.core_type = #tpu.core_type<tc>, window_params = [{pipeline_mode = #tpu.pipeline_mode<synchronous>, transform_indices = @transform_0, window_bounds = array<i64: 2, 32, 16>}, {pipeline_mode = #tpu.pipeline_mode<synchronous>, transform_indices = @transform_1, window_bounds = array<i64: 4, 32, 16>}, {pipeline_mode = #tpu.pipeline_mode<synchronous>, transform_indices = @transform_2, window_bounds = array<i64: 4, 32, 16>}, {pipeline_mode = #tpu.pipeline_mode<synchronous>, transform_indices = @transform_3, window_bounds = array<i64: 2, 32, 64>}, {pipeline_mode = #tpu.pipeline_mode<synchronous>, transform_indices = @transform_4, window_bounds = array<i64: 16, 64>}, {pipeline_mode = #tpu.pipeline_mode<synchronous>, transform_indices = @transform_5, window_bounds = array<i64: 128, 33>}, {pipeline_mode = #tpu.pipeline_mode<synchronous>, transform_indices = @transform_6, window_bounds = array<i64: 2, 32, 16>}]} {
    %c0 = arith.constant 0 : index
    %c0_0 = arith.constant 0 : index
    %0 = vector.load %arg6[%c0, %c0_0] : memref<128x33xf32, #tpu.memory_space<vmem>>, vector<32x32xf32>
    %c0_1 = arith.constant 0 : index
    %c32 = arith.constant 32 : index
    %1 = vector.load %arg6[%c0_1, %c32] : memref<128x33xf32, #tpu.memory_space<vmem>>, vector<32x1xf32>
    %c32_2 = arith.constant 32 : index
    %c0_3 = arith.constant 0 : index
    %2 = vector.load %arg6[%c32_2, %c0_3] : memref<128x33xf32, #tpu.memory_space<vmem>>, vector<32x32xf32>
    %c32_4 = arith.constant 32 : index
    %c32_5 = arith.constant 32 : index
    %3 = vector.load %arg6[%c32_4, %c32_5] : memref<128x33xf32, #tpu.memory_space<vmem>>, vector<32x1xf32>
    %c64 = arith.constant 64 : index
    %c0_6 = arith.constant 0 : index
    %4 = vector.load %arg6[%c64, %c0_6] : memref<128x33xf32, #tpu.memory_space<vmem>>, vector<32x32xf32>
    %c64_7 = arith.constant 64 : index
    %c32_8 = arith.constant 32 : index
    %5 = vector.load %arg6[%c64_7, %c32_8] : memref<128x33xf32, #tpu.memory_space<vmem>>, vector<32x1xf32>
    %c96 = arith.constant 96 : index
    %c0_9 = arith.constant 0 : index
    %6 = vector.load %arg6[%c96, %c0_9] : memref<128x33xf32, #tpu.memory_space<vmem>>, vector<32x32xf32>
    %c0_10 = arith.constant 0 : index
    %c0_11 = arith.constant 0 : index
    %c0_12 = arith.constant 0 : index
    %7 = vector.load %arg1[%c0_10, %c0_11, %c0_12] : memref<2x32x16xf32, #tpu.memory_space<vmem>>, vector<2x32x16xf32>
    %c0_13 = arith.constant 0 : index
    %c0_14 = arith.constant 0 : index
    %c0_15 = arith.constant 0 : index
    %8 = vector.load %arg2[%c0_13, %c0_14, %c0_15] : memref<4x32x16xf32, #tpu.memory_space<vmem>>, vector<4x32x16xf32>
    %c0_16 = arith.constant 0 : index
    %c0_17 = arith.constant 0 : index
    %c0_18 = arith.constant 0 : index
    %9 = vector.load %arg3[%c0_16, %c0_17, %c0_18] : memref<4x32x16xf32, #tpu.memory_space<vmem>>, vector<4x32x16xf32>
    %10 = vector.shape_cast %0 : vector<32x32xf32> to vector<1x32x32xf32>
    %11 = vector.shape_cast %10 : vector<1x32x32xf32> to vector<1x32x32xf32>
    %12 = vector.broadcast %11 : vector<1x32x32xf32> to vector<2x32x32xf32>
    "tpu.trace_start"() <{level = 10 : i32, message = "nij,njq->niq"}> : () -> ()
    %cst = arith.constant dense<0.000000e+00> : vector<2x32x16xf32>
    %13 = tpu.matmul %12, %7, %cst {dimension_numbers = #tpu.dot_dimension_numbers<[2], [1], [1], [2], [0, 0, 0, 1, 1, 2], [0], [0]>} : vector<2x32x32xf32>, vector<2x32x16xf32>, vector<2x32x16xf32> -> vector<2x32x16xf32>
    "tpu.trace_stop"() : () -> ()
    %14 = vector.shape_cast %1 : vector<32x1xf32> to vector<1x32x1xf32>
    %15 = vector.broadcast %14 : vector<1x32x1xf32> to vector<2x32x16xf32>
    %16 = arith.addf %13, %15 : vector<2x32x16xf32>
    %17 = vector.shape_cast %2 : vector<32x32xf32> to vector<1x32x32xf32>
    %18 = vector.shape_cast %17 : vector<1x32x32xf32> to vector<1x32x32xf32>
    %19 = vector.broadcast %18 : vector<1x32x32xf32> to vector<4x32x32xf32>
    "tpu.trace_start"() <{level = 10 : i32, message = "bij,bjs->bis"}> : () -> ()
    %cst_19 = arith.constant dense<0.000000e+00> : vector<4x32x16xf32>
    %20 = tpu.matmul %19, %8, %cst_19 {dimension_numbers = #tpu.dot_dimension_numbers<[2], [1], [1], [2], [0, 0, 0, 1, 1, 2], [0], [0]>} : vector<4x32x32xf32>, vector<4x32x16xf32>, vector<4x32x16xf32> -> vector<4x32x16xf32>
    "tpu.trace_stop"() : () -> ()
    %21 = vector.shape_cast %3 : vector<32x1xf32> to vector<1x32x1xf32>
    %22 = vector.broadcast %21 : vector<1x32x1xf32> to vector<4x32x16xf32>
    %23 = arith.addf %20, %22 : vector<4x32x16xf32>
    %24 = tpu.iota {dimensions = array<i32: 0>} : vector<16x16xi32>
    %25 = tpu.iota {dimensions = array<i32: 1>} : vector<16x16xi32>
    %26 = arith.cmpi eq, %24, %25 : vector<16x16xi32>
    %27 = arith.extui %26 : vector<16x16xi1> to vector<16x16xi32>
    %28 = arith.sitofp %27 : vector<16x16xi32> to vector<16x16xf32>
    %29 = vector.shape_cast %28 : vector<16x16xf32> to vector<1x16x16xf32>
    %30 = vector.shape_cast %29 : vector<1x16x16xf32> to vector<1x16x16xf32>
    %31 = vector.broadcast %30 : vector<1x16x16xf32> to vector<2x16x16xf32>
    "tpu.trace_start"() <{level = 10 : i32, message = "nqj,ncj->nqc"}> : () -> ()
    %cst_20 = arith.constant dense<0.000000e+00> : vector<2x16x32xf32>
    %32 = tpu.matmul %31, %16, %cst_20 {dimension_numbers = #tpu.dot_dimension_numbers<[2], [2], [1], [1], [0, 0, 0, 1, 1, 1], [0], [0]>} : vector<2x16x16xf32>, vector<2x32x16xf32>, vector<2x16x32xf32> -> vector<2x16x32xf32>
    "tpu.trace_stop"() : () -> ()
    %33 = vector.shape_cast %32 : vector<2x16x32xf32> to vector<2x1x16x32xf32>
    %34 = vector.shape_cast %33 : vector<2x1x16x32xf32> to vector<2x1x16x32xf32>
    %35 = vector.broadcast %34 : vector<2x1x16x32xf32> to vector<2x2x16x32xf32>
    %36 = vector.shape_cast %35 : vector<2x2x16x32xf32> to vector<4x16x32xf32>
    "tpu.trace_start"() <{level = 10 : i32, message = "bqc,bcs->bqs"}> : () -> ()
    %cst_21 = arith.constant dense<0.000000e+00> : vector<4x16x16xf32>
    %37 = tpu.matmul %36, %23, %cst_21 {dimension_numbers = #tpu.dot_dimension_numbers<[2], [1], [1], [2], [0, 0, 0, 1, 1, 2], [0], [0]>} : vector<4x16x32xf32>, vector<4x32x16xf32>, vector<4x16x16xf32> -> vector<4x16x16xf32>
    "tpu.trace_stop"() : () -> ()
    %38 = vector.shape_cast %37 : vector<4x16x16xf32> to vector<2x2x16x16xf32>
    %cst_22 = arith.constant dense<0xFF800000> : vector<2x2x16xf32>
    %39 = vector.multi_reduction <maximumf>, %38, %cst_22 [3] : vector<2x2x16x16xf32> to vector<2x2x16xf32>
    %40 = vector.shape_cast %39 : vector<2x2x16xf32> to vector<2x2x16x1xf32>
    %cst_23 = arith.constant dense<0xFF800000> : vector<2x16x1xf32>
    %41 = vector.multi_reduction <maximumf>, %40, %cst_23 [1] : vector<2x2x16x1xf32> to vector<2x16x1xf32>
    %42 = vector.shape_cast %41 : vector<2x16x1xf32> to vector<2x1x16x1xf32>
    %43 = vector.broadcast %42 : vector<2x1x16x1xf32> to vector<2x2x16x16xf32>
    %44 = arith.subf %38, %43 : vector<2x2x16x16xf32>
    %45 = math.exp %44 : vector<2x2x16x16xf32>
    %cst_24 = arith.constant dense<0.000000e+00> : vector<2x2x16xf32>
    %46 = vector.multi_reduction <add>, %45, %cst_24 [3] : vector<2x2x16x16xf32> to vector<2x2x16xf32>
    %47 = vector.shape_cast %46 : vector<2x2x16xf32> to vector<2x2x16x1xf32>
    %cst_25 = arith.constant dense<0.000000e+00> : vector<2x16x1xf32>
    %48 = vector.multi_reduction <add>, %47, %cst_25 [1] : vector<2x2x16x1xf32> to vector<2x16x1xf32>
    %49 = vector.shape_cast %48 : vector<2x16x1xf32> to vector<2x1x16x1xf32>
    %50 = tpu.reciprocal %49 {approx = true} : vector<2x1x16x1xf32> -> vector<2x1x16x1xf32>
    %51 = vector.broadcast %50 : vector<2x1x16x1xf32> to vector<2x2x16x16xf32>
    %52 = arith.mulf %45, %51 : vector<2x2x16x16xf32>
    %53 = vector.shape_cast %52 : vector<2x2x16x16xf32> to vector<4x16x16xf32>
    "tpu.trace_start"() <{level = 10 : i32, message = "bqs,bcs->bqc"}> : () -> ()
    %cst_26 = arith.constant dense<0.000000e+00> : vector<4x16x32xf32>
    %54 = tpu.matmul %53, %9, %cst_26 {dimension_numbers = #tpu.dot_dimension_numbers<[2], [2], [1], [1], [0, 0, 0, 1, 1, 1], [0], [0]>} : vector<4x16x16xf32>, vector<4x32x16xf32>, vector<4x16x32xf32> -> vector<4x16x32xf32>
    "tpu.trace_stop"() : () -> ()
    %55 = vector.shape_cast %54 : vector<4x16x32xf32> to vector<2x2x16x32xf32>
    %cst_27 = arith.constant dense<0.000000e+00> : vector<2x16x32xf32>
    %56 = vector.multi_reduction <add>, %55, %cst_27 [1] : vector<2x2x16x32xf32> to vector<2x16x32xf32>
    %57 = vector.extract_strided_slice %56 {offsets = [0, 0, 0], sizes = [2, 1, 16], strides = [1, 1, 1]} : vector<2x16x32xf32> to vector<2x1x16xf32>
    %c0_28 = arith.constant 0 : index
    %c0_29 = arith.constant 0 : index
    %c0_30 = arith.constant 0 : index
    %58 = vector.load %arg8[%c0_28, %c0_29, %c0_30] : memref<2x32x16xf32, #tpu.memory_space<vmem>>, vector<2x1x16xf32>
    tpu.vector_store %arg8[%c0_28, %c0_29, %c0_30], %57 {strides = array<i32>} : memref<2x32x16xf32, #tpu.memory_space<vmem>>, vector<2x1x16xf32>,
    %59 = vector.extract_strided_slice %56 {offsets = [0, 0, 16], sizes = [2, 1, 16], strides = [1, 1, 1]} : vector<2x16x32xf32> to vector<2x1x16xf32>
    %c0_31 = arith.constant 0 : index
    %c1 = arith.constant 1 : index
    %c0_32 = arith.constant 0 : index
    %60 = vector.load %arg8[%c0_31, %c1, %c0_32] : memref<2x32x16xf32, #tpu.memory_space<vmem>>, vector<2x1x16xf32>
    tpu.vector_store %arg8[%c0_31, %c1, %c0_32], %59 {strides = array<i32>} : memref<2x32x16xf32, #tpu.memory_space<vmem>>, vector<2x1x16xf32>,
    %61 = vector.extract_strided_slice %56 {offsets = [0, 1, 0], sizes = [2, 1, 16], strides = [1, 1, 1]} : vector<2x16x32xf32> to vector<2x1x16xf32>
    %c0_33 = arith.constant 0 : index
    %c2 = arith.constant 2 : index
    %c0_34 = arith.constant 0 : index
    %62 = vector.load %arg8[%c0_33, %c2, %c0_34] : memref<2x32x16xf32, #tpu.memory_space<vmem>>, vector<2x1x16xf32>
    tpu.vector_store %arg8[%c0_33, %c2, %c0_34], %61 {strides = array<i32>} : memref<2x32x16xf32, #tpu.memory_space<vmem>>, vector<2x1x16xf32>,
    %63 = vector.extract_strided_slice %56 {offsets = [0, 1, 16], sizes = [2, 1, 16], strides = [1, 1, 1]} : vector<2x16x32xf32> to vector<2x1x16xf32>
    %c0_35 = arith.constant 0 : index
    %c3 = arith.constant 3 : index
    %c0_36 = arith.constant 0 : index
    %64 = vector.load %arg8[%c0_35, %c3, %c0_36] : memref<2x32x16xf32, #tpu.memory_space<vmem>>, vector<2x1x16xf32>
    tpu.vector_store %arg8[%c0_35, %c3, %c0_36], %63 {strides = array<i32>} : memref<2x32x16xf32, #tpu.memory_space<vmem>>, vector<2x1x16xf32>,
    %65 = vector.extract_strided_slice %56 {offsets = [0, 2, 0], sizes = [2, 1, 16], strides = [1, 1, 1]} : vector<2x16x32xf32> to vector<2x1x16xf32>
    %c0_37 = arith.constant 0 : index
    %c4 = arith.constant 4 : index
    %c0_38 = arith.constant 0 : index
    %66 = vector.load %arg8[%c0_37, %c4, %c0_38] : memref<2x32x16xf32, #tpu.memory_space<vmem>>, vector<2x1x16xf32>
    tpu.vector_store %arg8[%c0_37, %c4, %c0_38], %65 {strides = array<i32>} : memref<2x32x16xf32, #tpu.memory_space<vmem>>, vector<2x1x16xf32>,
    %67 = vector.extract_strided_slice %56 {offsets = [0, 2, 16], sizes = [2, 1, 16], strides = [1, 1, 1]} : vector<2x16x32xf32> to vector<2x1x16xf32>
    %c0_39 = arith.constant 0 : index
    %c5 = arith.constant 5 : index
    %c0_40 = arith.constant 0 : index
    %68 = vector.load %arg8[%c0_39, %c5, %c0_40] : memref<2x32x16xf32, #tpu.memory_space<vmem>>, vector<2x1x16xf32>
    tpu.vector_store %arg8[%c0_39, %c5, %c0_40], %67 {strides = array<i32>} : memref<2x32x16xf32, #tpu.memory_space<vmem>>, vector<2x1x16xf32>,
    %69 = vector.extract_strided_slice %56 {offsets = [0, 3, 0], sizes = [2, 1, 16], strides = [1, 1, 1]} : vector<2x16x32xf32> to vector<2x1x16xf32>
    %c0_41 = arith.constant 0 : index
    %c6 = arith.constant 6 : index
    %c0_42 = arith.constant 0 : index
    %70 = vector.load %arg8[%c0_41, %c6, %c0_42] : memref<2x32x16xf32, #tpu.memory_space<vmem>>, vector<2x1x16xf32>
    tpu.vector_store %arg8[%c0_41, %c6, %c0_42], %69 {strides = array<i32>} : memref<2x32x16xf32, #tpu.memory_space<vmem>>, vector<2x1x16xf32>,
    %71 = vector.extract_strided_slice %56 {offsets = [0, 3, 16], sizes = [2, 1, 16], strides = [1, 1, 1]} : vector<2x16x32xf32> to vector<2x1x16xf32>
    %c0_43 = arith.constant 0 : index
    %c7 = arith.constant 7 : index
    %c0_44 = arith.constant 0 : index
    %72 = vector.load %arg8[%c0_43, %c7, %c0_44] : memref<2x32x16xf32, #tpu.memory_space<vmem>>, vector<2x1x16xf32>
    tpu.vector_store %arg8[%c0_43, %c7, %c0_44], %71 {strides = array<i32>} : memref<2x32x16xf32, #tpu.memory_space<vmem>>, vector<2x1x16xf32>,
    %73 = vector.extract_strided_slice %56 {offsets = [0, 4, 0], sizes = [2, 1, 16], strides = [1, 1, 1]} : vector<2x16x32xf32> to vector<2x1x16xf32>
    %c0_45 = arith.constant 0 : index
    %c8 = arith.constant 8 : index
    %c0_46 = arith.constant 0 : index
    %74 = vector.load %arg8[%c0_45, %c8, %c0_46] : memref<2x32x16xf32, #tpu.memory_space<vmem>>, vector<2x1x16xf32>
    tpu.vector_store %arg8[%c0_45, %c8, %c0_46], %73 {strides = array<i32>} : memref<2x32x16xf32, #tpu.memory_space<vmem>>, vector<2x1x16xf32>,
    %75 = vector.extract_strided_slice %56 {offsets = [0, 4, 16], sizes = [2, 1, 16], strides = [1, 1, 1]} : vector<2x16x32xf32> to vector<2x1x16xf32>
    %c0_47 = arith.constant 0 : index
    %c9 = arith.constant 9 : index
    %c0_48 = arith.constant 0 : index
    %76 = vector.load %arg8[%c0_47, %c9, %c0_48] : memref<2x32x16xf32, #tpu.memory_space<vmem>>, vector<2x1x16xf32>
    tpu.vector_store %arg8[%c0_47, %c9, %c0_48], %75 {strides = array<i32>} : memref<2x32x16xf32, #tpu.memory_space<vmem>>, vector<2x1x16xf32>,
    %77 = vector.extract_strided_slice %56 {offsets = [0, 5, 0], sizes = [2, 1, 16], strides = [1, 1, 1]} : vector<2x16x32xf32> to vector<2x1x16xf32>
    %c0_49 = arith.constant 0 : index
    %c10 = arith.constant 10 : index
    %c0_50 = arith.constant 0 : index
    %78 = vector.load %arg8[%c0_49, %c10, %c0_50] : memref<2x32x16xf32, #tpu.memory_space<vmem>>, vector<2x1x16xf32>
    tpu.vector_store %arg8[%c0_49, %c10, %c0_50], %77 {strides = array<i32>} : memref<2x32x16xf32, #tpu.memory_space<vmem>>, vector<2x1x16xf32>,
    %79 = vector.extract_strided_slice %56 {offsets = [0, 5, 16], sizes = [2, 1, 16], strides = [1, 1, 1]} : vector<2x16x32xf32> to vector<2x1x16xf32>
    %c0_51 = arith.constant 0 : index
    %c11 = arith.constant 11 : index
    %c0_52 = arith.constant 0 : index
    %80 = vector.load %arg8[%c0_51, %c11, %c0_52] : memref<2x32x16xf32, #tpu.memory_space<vmem>>, vector<2x1x16xf32>
    tpu.vector_store %arg8[%c0_51, %c11, %c0_52], %79 {strides = array<i32>} : memref<2x32x16xf32, #tpu.memory_space<vmem>>, vector<2x1x16xf32>,
    %81 = vector.extract_strided_slice %56 {offsets = [0, 6, 0], sizes = [2, 1, 16], strides = [1, 1, 1]} : vector<2x16x32xf32> to vector<2x1x16xf32>
    %c0_53 = arith.constant 0 : index
    %c12 = arith.constant 12 : index
    %c0_54 = arith.constant 0 : index
    %82 = vector.load %arg8[%c0_53, %c12, %c0_54] : memref<2x32x16xf32, #tpu.memory_space<vmem>>, vector<2x1x16xf32>
    tpu.vector_store %arg8[%c0_53, %c12, %c0_54], %81 {strides = array<i32>} : memref<2x32x16xf32, #tpu.memory_space<vmem>>, vector<2x1x16xf32>,
    %83 = vector.extract_strided_slice %56 {offsets = [0, 6, 16], sizes = [2, 1, 16], strides = [1, 1, 1]} : vector<2x16x32xf32> to vector<2x1x16xf32>
    %c0_55 = arith.constant 0 : index
    %c13 = arith.constant 13 : index
    %c0_56 = arith.constant 0 : index
    %84 = vector.load %arg8[%c0_55, %c13, %c0_56] : memref<2x32x16xf32, #tpu.memory_space<vmem>>, vector<2x1x16xf32>
    tpu.vector_store %arg8[%c0_55, %c13, %c0_56], %83 {strides = array<i32>} : memref<2x32x16xf32, #tpu.memory_space<vmem>>, vector<2x1x16xf32>,
    %85 = vector.extract_strided_slice %56 {offsets = [0, 7, 0], sizes = [2, 1, 16], strides = [1, 1, 1]} : vector<2x16x32xf32> to vector<2x1x16xf32>
    %c0_57 = arith.constant 0 : index
    %c14 = arith.constant 14 : index
    %c0_58 = arith.constant 0 : index
    %86 = vector.load %arg8[%c0_57, %c14, %c0_58] : memref<2x32x16xf32, #tpu.memory_space<vmem>>, vector<2x1x16xf32>
    tpu.vector_store %arg8[%c0_57, %c14, %c0_58], %85 {strides = array<i32>} : memref<2x32x16xf32, #tpu.memory_space<vmem>>, vector<2x1x16xf32>,
    %87 = vector.extract_strided_slice %56 {offsets = [0, 7, 16], sizes = [2, 1, 16], strides = [1, 1, 1]} : vector<2x16x32xf32> to vector<2x1x16xf32>
    %c0_59 = arith.constant 0 : index
    %c15 = arith.constant 15 : index
    %c0_60 = arith.constant 0 : index
    %88 = vector.load %arg8[%c0_59, %c15, %c0_60] : memref<2x32x16xf32, #tpu.memory_space<vmem>>, vector<2x1x16xf32>
    tpu.vector_store %arg8[%c0_59, %c15, %c0_60], %87 {strides = array<i32>} : memref<2x32x16xf32, #tpu.memory_space<vmem>>, vector<2x1x16xf32>,
    %89 = vector.extract_strided_slice %56 {offsets = [0, 8, 0], sizes = [2, 1, 16], strides = [1, 1, 1]} : vector<2x16x32xf32> to vector<2x1x16xf32>
    %c0_61 = arith.constant 0 : index
    %c16 = arith.constant 16 : index
    %c0_62 = arith.constant 0 : index
    %90 = vector.load %arg8[%c0_61, %c16, %c0_62] : memref<2x32x16xf32, #tpu.memory_space<vmem>>, vector<2x1x16xf32>
    tpu.vector_store %arg8[%c0_61, %c16, %c0_62], %89 {strides = array<i32>} : memref<2x32x16xf32, #tpu.memory_space<vmem>>, vector<2x1x16xf32>,
    %91 = vector.extract_strided_slice %56 {offsets = [0, 8, 16], sizes = [2, 1, 16], strides = [1, 1, 1]} : vector<2x16x32xf32> to vector<2x1x16xf32>
    %c0_63 = arith.constant 0 : index
    %c17 = arith.constant 17 : index
    %c0_64 = arith.constant 0 : index
    %92 = vector.load %arg8[%c0_63, %c17, %c0_64] : memref<2x32x16xf32, #tpu.memory_space<vmem>>, vector<2x1x16xf32>
    tpu.vector_store %arg8[%c0_63, %c17, %c0_64], %91 {strides = array<i32>} : memref<2x32x16xf32, #tpu.memory_space<vmem>>, vector<2x1x16xf32>,
    %93 = vector.extract_strided_slice %56 {offsets = [0, 9, 0], sizes = [2, 1, 16], strides = [1, 1, 1]} : vector<2x16x32xf32> to vector<2x1x16xf32>
    %c0_65 = arith.constant 0 : index
    %c18 = arith.constant 18 : index
    %c0_66 = arith.constant 0 : index
    %94 = vector.load %arg8[%c0_65, %c18, %c0_66] : memref<2x32x16xf32, #tpu.memory_space<vmem>>, vector<2x1x16xf32>
    tpu.vector_store %arg8[%c0_65, %c18, %c0_66], %93 {strides = array<i32>} : memref<2x32x16xf32, #tpu.memory_space<vmem>>, vector<2x1x16xf32>,
    %95 = vector.extract_strided_slice %56 {offsets = [0, 9, 16], sizes = [2, 1, 16], strides = [1, 1, 1]} : vector<2x16x32xf32> to vector<2x1x16xf32>
    %c0_67 = arith.constant 0 : index
    %c19 = arith.constant 19 : index
    %c0_68 = arith.constant 0 : index
    %96 = vector.load %arg8[%c0_67, %c19, %c0_68] : memref<2x32x16xf32, #tpu.memory_space<vmem>>, vector<2x1x16xf32>
    tpu.vector_store %arg8[%c0_67, %c19, %c0_68], %95 {strides = array<i32>} : memref<2x32x16xf32, #tpu.memory_space<vmem>>, vector<2x1x16xf32>,
    %97 = vector.extract_strided_slice %56 {offsets = [0, 10, 0], sizes = [2, 1, 16], strides = [1, 1, 1]} : vector<2x16x32xf32> to vector<2x1x16xf32>
    %c0_69 = arith.constant 0 : index
    %c20 = arith.constant 20 : index
    %c0_70 = arith.constant 0 : index
    %98 = vector.load %arg8[%c0_69, %c20, %c0_70] : memref<2x32x16xf32, #tpu.memory_space<vmem>>, vector<2x1x16xf32>
    tpu.vector_store %arg8[%c0_69, %c20, %c0_70], %97 {strides = array<i32>} : memref<2x32x16xf32, #tpu.memory_space<vmem>>, vector<2x1x16xf32>,
    %99 = vector.extract_strided_slice %56 {offsets = [0, 10, 16], sizes = [2, 1, 16], strides = [1, 1, 1]} : vector<2x16x32xf32> to vector<2x1x16xf32>
    %c0_71 = arith.constant 0 : index
    %c21 = arith.constant 21 : index
    %c0_72 = arith.constant 0 : index
    %100 = vector.load %arg8[%c0_71, %c21, %c0_72] : memref<2x32x16xf32, #tpu.memory_space<vmem>>, vector<2x1x16xf32>
    tpu.vector_store %arg8[%c0_71, %c21, %c0_72], %99 {strides = array<i32>} : memref<2x32x16xf32, #tpu.memory_space<vmem>>, vector<2x1x16xf32>,
    %101 = vector.extract_strided_slice %56 {offsets = [0, 11, 0], sizes = [2, 1, 16], strides = [1, 1, 1]} : vector<2x16x32xf32> to vector<2x1x16xf32>
    %c0_73 = arith.constant 0 : index
    %c22 = arith.constant 22 : index
    %c0_74 = arith.constant 0 : index
    %102 = vector.load %arg8[%c0_73, %c22, %c0_74] : memref<2x32x16xf32, #tpu.memory_space<vmem>>, vector<2x1x16xf32>
    tpu.vector_store %arg8[%c0_73, %c22, %c0_74], %101 {strides = array<i32>} : memref<2x32x16xf32, #tpu.memory_space<vmem>>, vector<2x1x16xf32>,
    %103 = vector.extract_strided_slice %56 {offsets = [0, 11, 16], sizes = [2, 1, 16], strides = [1, 1, 1]} : vector<2x16x32xf32> to vector<2x1x16xf32>
    %c0_75 = arith.constant 0 : index
    %c23 = arith.constant 23 : index
    %c0_76 = arith.constant 0 : index
    %104 = vector.load %arg8[%c0_75, %c23, %c0_76] : memref<2x32x16xf32, #tpu.memory_space<vmem>>, vector<2x1x16xf32>
    tpu.vector_store %arg8[%c0_75, %c23, %c0_76], %103 {strides = array<i32>} : memref<2x32x16xf32, #tpu.memory_space<vmem>>, vector<2x1x16xf32>,
    %105 = vector.extract_strided_slice %56 {offsets = [0, 12, 0], sizes = [2, 1, 16], strides = [1, 1, 1]} : vector<2x16x32xf32> to vector<2x1x16xf32>
    %c0_77 = arith.constant 0 : index
    %c24 = arith.constant 24 : index
    %c0_78 = arith.constant 0 : index
    %106 = vector.load %arg8[%c0_77, %c24, %c0_78] : memref<2x32x16xf32, #tpu.memory_space<vmem>>, vector<2x1x16xf32>
    tpu.vector_store %arg8[%c0_77, %c24, %c0_78], %105 {strides = array<i32>} : memref<2x32x16xf32, #tpu.memory_space<vmem>>, vector<2x1x16xf32>,
    %107 = vector.extract_strided_slice %56 {offsets = [0, 12, 16], sizes = [2, 1, 16], strides = [1, 1, 1]} : vector<2x16x32xf32> to vector<2x1x16xf32>
    %c0_79 = arith.constant 0 : index
    %c25 = arith.constant 25 : index
    %c0_80 = arith.constant 0 : index
    %108 = vector.load %arg8[%c0_79, %c25, %c0_80] : memref<2x32x16xf32, #tpu.memory_space<vmem>>, vector<2x1x16xf32>
    tpu.vector_store %arg8[%c0_79, %c25, %c0_80], %107 {strides = array<i32>} : memref<2x32x16xf32, #tpu.memory_space<vmem>>, vector<2x1x16xf32>,
    %109 = vector.extract_strided_slice %56 {offsets = [0, 13, 0], sizes = [2, 1, 16], strides = [1, 1, 1]} : vector<2x16x32xf32> to vector<2x1x16xf32>
    %c0_81 = arith.constant 0 : index
    %c26 = arith.constant 26 : index
    %c0_82 = arith.constant 0 : index
    %110 = vector.load %arg8[%c0_81, %c26, %c0_82] : memref<2x32x16xf32, #tpu.memory_space<vmem>>, vector<2x1x16xf32>
    tpu.vector_store %arg8[%c0_81, %c26, %c0_82], %109 {strides = array<i32>} : memref<2x32x16xf32, #tpu.memory_space<vmem>>, vector<2x1x16xf32>,
    %111 = vector.extract_strided_slice %56 {offsets = [0, 13, 16], sizes = [2, 1, 16], strides = [1, 1, 1]} : vector<2x16x32xf32> to vector<2x1x16xf32>
    %c0_83 = arith.constant 0 : index
    %c27 = arith.constant 27 : index
    %c0_84 = arith.constant 0 : index
    %112 = vector.load %arg8[%c0_83, %c27, %c0_84] : memref<2x32x16xf32, #tpu.memory_space<vmem>>, vector<2x1x16xf32>
    tpu.vector_store %arg8[%c0_83, %c27, %c0_84], %111 {strides = array<i32>} : memref<2x32x16xf32, #tpu.memory_space<vmem>>, vector<2x1x16xf32>,
    %113 = vector.extract_strided_slice %56 {offsets = [0, 14, 0], sizes = [2, 1, 16], strides = [1, 1, 1]} : vector<2x16x32xf32> to vector<2x1x16xf32>
    %c0_85 = arith.constant 0 : index
    %c28 = arith.constant 28 : index
    %c0_86 = arith.constant 0 : index
    %114 = vector.load %arg8[%c0_85, %c28, %c0_86] : memref<2x32x16xf32, #tpu.memory_space<vmem>>, vector<2x1x16xf32>
    tpu.vector_store %arg8[%c0_85, %c28, %c0_86], %113 {strides = array<i32>} : memref<2x32x16xf32, #tpu.memory_space<vmem>>, vector<2x1x16xf32>,
    %115 = vector.extract_strided_slice %56 {offsets = [0, 14, 16], sizes = [2, 1, 16], strides = [1, 1, 1]} : vector<2x16x32xf32> to vector<2x1x16xf32>
    %c0_87 = arith.constant 0 : index
    %c29 = arith.constant 29 : index
    %c0_88 = arith.constant 0 : index
    %116 = vector.load %arg8[%c0_87, %c29, %c0_88] : memref<2x32x16xf32, #tpu.memory_space<vmem>>, vector<2x1x16xf32>
    tpu.vector_store %arg8[%c0_87, %c29, %c0_88], %115 {strides = array<i32>} : memref<2x32x16xf32, #tpu.memory_space<vmem>>, vector<2x1x16xf32>,
    %117 = vector.extract_strided_slice %56 {offsets = [0, 15, 0], sizes = [2, 1, 16], strides = [1, 1, 1]} : vector<2x16x32xf32> to vector<2x1x16xf32>
    %c0_89 = arith.constant 0 : index
    %c30 = arith.constant 30 : index
    %c0_90 = arith.constant 0 : index
    %118 = vector.load %arg8[%c0_89, %c30, %c0_90] : memref<2x32x16xf32, #tpu.memory_space<vmem>>, vector<2x1x16xf32>
    tpu.vector_store %arg8[%c0_89, %c30, %c0_90], %117 {strides = array<i32>} : memref<2x32x16xf32, #tpu.memory_space<vmem>>, vector<2x1x16xf32>,
    %119 = vector.extract_strided_slice %56 {offsets = [0, 15, 16], sizes = [2, 1, 16], strides = [1, 1, 1]} : vector<2x16x32xf32> to vector<2x1x16xf32>
    %c0_91 = arith.constant 0 : index
    %c31 = arith.constant 31 : index
    %c0_92 = arith.constant 0 : index
    %120 = vector.load %arg8[%c0_91, %c31, %c0_92] : memref<2x32x16xf32, #tpu.memory_space<vmem>>, vector<2x1x16xf32>
    tpu.vector_store %arg8[%c0_91, %c31, %c0_92], %119 {strides = array<i32>} : memref<2x32x16xf32, #tpu.memory_space<vmem>>, vector<2x1x16xf32>,
    %c0_93 = arith.constant 0 : index
    %c0_94 = arith.constant 0 : index
    %c0_95 = arith.constant 0 : index
    %121 = vector.load %arg8[%c0_93, %c0_94, %c0_95] : memref<2x32x16xf32, #tpu.memory_space<vmem>>, vector<2x32x16xf32>
    %c0_96 = arith.constant 0 : index
    %c0_97 = arith.constant 0 : index
    %c0_98 = arith.constant 0 : index
    %122 = vector.load %arg4[%c0_96, %c0_97, %c0_98] : memref<2x32x64xf32, #tpu.memory_space<vmem>>, vector<2x32x64xf32>
    %c0_99 = arith.constant 0 : index
    %c0_100 = arith.constant 0 : index
    %123 = vector.load %arg5[%c0_99, %c0_100] : memref<16x64xf32, #tpu.memory_space<vmem>>, vector<16x64xf32>
    %124 = vector.shape_cast %123 : vector<16x64xf32> to vector<1x16x64xf32>
    %125 = vector.shape_cast %124 : vector<1x16x64xf32> to vector<1x16x64xf32>
    %126 = vector.broadcast %125 : vector<1x16x64xf32> to vector<2x16x64xf32>
    "tpu.trace_start"() <{level = 10 : i32, message = "nci,noi->nco"}> : () -> ()
    %cst_101 = arith.constant dense<0.000000e+00> : vector<2x32x16xf32>
    %127 = tpu.matmul %122, %126, %cst_101 {dimension_numbers = #tpu.dot_dimension_numbers<[2], [2], [1], [1], [0, 0, 0, 1, 1, 1], [0], [0]>} : vector<2x32x64xf32>, vector<2x16x64xf32>, vector<2x32x16xf32> -> vector<2x32x16xf32>
    "tpu.trace_stop"() : () -> ()
    %128 = vector.shape_cast %4 : vector<32x32xf32> to vector<1x32x32xf32>
    %129 = vector.shape_cast %128 : vector<1x32x32xf32> to vector<1x32x32xf32>
    %130 = vector.broadcast %129 : vector<1x32x32xf32> to vector<2x32x32xf32>
    %131 = vector.shape_cast %6 : vector<32x32xf32> to vector<1x32x32xf32>
    %132 = vector.shape_cast %131 : vector<1x32x32xf32> to vector<1x32x32xf32>
    %133 = vector.broadcast %132 : vector<1x32x32xf32> to vector<2x32x32xf32>
    "tpu.trace_start"() <{level = 10 : i32, message = "nij,njq->niq"}> : () -> ()
    %cst_102 = arith.constant dense<0.000000e+00> : vector<2x32x16xf32>
    %134 = tpu.matmul %130, %121, %cst_102 {dimension_numbers = #tpu.dot_dimension_numbers<[2], [1], [1], [2], [0, 0, 0, 1, 1, 2], [0], [0]>} : vector<2x32x32xf32>, vector<2x32x16xf32>, vector<2x32x16xf32> -> vector<2x32x16xf32>
    %cst_103 = arith.constant dense<0.000000e+00> : vector<2x32x16xf32>
    %135 = tpu.matmul %133, %127, %cst_103 {dimension_numbers = #tpu.dot_dimension_numbers<[2], [1], [1], [2], [0, 0, 0, 1, 1, 2], [0], [0]>} : vector<2x32x32xf32>, vector<2x32x16xf32>, vector<2x32x16xf32> -> vector<2x32x16xf32>
    "tpu.trace_stop"() : () -> ()
    %136 = arith.addf %134, %135 : vector<2x32x16xf32>
    %137 = vector.shape_cast %5 : vector<32x1xf32> to vector<1x32x1xf32>
    %138 = vector.broadcast %137 : vector<1x32x1xf32> to vector<2x32x16xf32>
    %139 = arith.addf %136, %138 : vector<2x32x16xf32>
    %cst_104 = arith.constant 0.000000e+00 : f32
    %140 = vector.broadcast %cst_104 : f32 to vector<2x32x16xf32>
    %141 = arith.maximumf %139, %140 : vector<2x32x16xf32>
    %c0_105 = arith.constant 0 : index
    %c0_106 = arith.constant 0 : index
    %c0_107 = arith.constant 0 : index
    %142 = vector.load %arg7[%c0_105, %c0_106, %c0_107] : memref<2x32x16xf32, #tpu.memory_space<vmem>>, vector<2x32x16xf32>
    tpu.vector_store %arg7[%c0_105, %c0_106, %c0_107], %141 {strides = array<i32>} : memref<2x32x16xf32, #tpu.memory_space<vmem>>, vector<2x32x16xf32>,
    return
  }
  func.func @transform_0(%arg0: i32) -> (i32, i32, i32) {
    %c0_i32 = arith.constant 0 : i32
    %c0_i32_0 = arith.constant 0 : i32
    %c0_i32_1 = arith.constant 0 : i32
    %c0_i32_2 = arith.constant 0 : i32
    return %c0_i32, %c0_i32_0, %c0_i32_1 : i32, i32, i32
  }
  func.func @transform_1(%arg0: i32) -> (i32, i32, i32) {
    %c0_i32 = arith.constant 0 : i32
    %c0_i32_0 = arith.constant 0 : i32
    %c0_i32_1 = arith.constant 0 : i32
    %c0_i32_2 = arith.constant 0 : i32
    return %c0_i32, %c0_i32_0, %c0_i32_1 : i32, i32, i32
  }
  func.func @transform_2(%arg0: i32) -> (i32, i32, i32) {
    %c0_i32 = arith.constant 0 : i32
    %c0_i32_0 = arith.constant 0 : i32
    %c0_i32_1 = arith.constant 0 : i32
    %c0_i32_2 = arith.constant 0 : i32
    return %c0_i32, %c0_i32_0, %c0_i32_1 : i32, i32, i32
  }
  func.func @transform_3(%arg0: i32) -> (i32, i32, i32) {
    %c0_i32 = arith.constant 0 : i32
    %c0_i32_0 = arith.constant 0 : i32
    %c0_i32_1 = arith.constant 0 : i32
    %c0_i32_2 = arith.constant 0 : i32
    return %c0_i32, %c0_i32_0, %c0_i32_1 : i32, i32, i32
  }
  func.func @transform_4(%arg0: i32) -> (i32, i32) {
    %c0_i32 = arith.constant 0 : i32
    %c0_i32_0 = arith.constant 0 : i32
    %c0_i32_1 = arith.constant 0 : i32
    return %c0_i32, %c0_i32_0 : i32, i32
  }
  func.func @transform_5(%arg0: i32) -> (i32, i32) {
    %c0_i32 = arith.constant 0 : i32
    %c0_i32_0 = arith.constant 0 : i32
    %c0_i32_1 = arith.constant 0 : i32
    return %c0_i32, %c0_i32_0 : i32, i32
  }
  func.func @transform_6(%arg0: i32) -> (i32, i32, i32) {
    %c0_i32 = arith.constant 0 : i32
    %c0_i32_0 = arith.constant 0 : i32
    %c0_i32_1 = arith.constant 0 : i32
    %c0_i32_2 = arith.constant 0 : i32
    return %c0_i32, %c0_i32_0, %c0_i32_1 : i32, i32, i32
  }
}

</mosaic_0001>

<llo_original>
// kernel: gau_forward.1
$region0: #{gau_forward.1}
  #allocation0 [shape = 'u32[]', space=smem, size = 0x4, offset = 0x4, fixed_abs, tag = 'smem constant byte address 0x4 - core index']
  #allocation1 [shape = 'u32[144,128]{1,0:T(1,128)}', space=vmem, size = 0x12000, scoped, tag = 'internal scratch']
  #allocation2 [shape = 'f32[2,32,16]{2,1,0:T(8,128)}', space=vmem, size = 0x8000, scoped, tag = 'scratch operand']
  %s0 = inlined_call_operand.vmem [shape: f32[2,32,16], index: 0, kind: input, shape index: {}]
  %s1 = inlined_call_operand.vmem [shape: f32[4,32,16], index: 1, kind: input, shape index: {}]
  %s2 = inlined_call_operand.vmem [shape: f32[4,32,16], index: 2, kind: input, shape index: {}]
  %s3 = inlined_call_operand.vmem [shape: f32[2,32,64], index: 3, kind: input, shape index: {}]
  %s4 = inlined_call_operand.vmem [shape: f32[16,64], index: 4, kind: input, shape index: {}]
  %s5 = inlined_call_operand.vmem [shape: f32[128,33], index: 5, kind: input, shape index: {}]
  %s6 = inlined_call_operand.vmem [shape: f32[2,32,16], index: 6, kind: output, shape index: {}]
  %s7 = sld [smem:[#allocation0]]
  $region34: #{gau_forward.1} parent=0
    _
  %s9 = ssub.s32 1, %s7
  %s10 = scalar_select 0, %s9, %s7
  // Predicated region
  $region2: #{gau_forward.1} parent=0 // pred_check
    _
  $region3: #{gau_forward.1} parent=0 // pred_check_branch
    %12 = sbr.rel (0) target = $region5
  $region4: #{gau_forward.1} parent=0 // pred_region
    _
  $region5: #{gau_forward.1} parent=0 // pred_fallthru
    _
  // Predicated region
  $region6: #{gau_forward.1} parent=0 // pred_check
    _
  $region7: #{gau_forward.1} parent=0 // pred_check_branch
    %14 = sbr.rel (0) target = $region9
  $region8: #{gau_forward.1} parent=0 // pred_region
    _
  $region9: #{gau_forward.1} parent=0 // pred_fallthru
    _
  // Predicated region
  $region10: #{gau_forward.1} parent=0 // pred_check
    _
  $region11: #{gau_forward.1} parent=0 // pred_check_branch
    %16 = sbr.rel (0) target = $region13
  $region12: #{gau_forward.1} parent=0 // pred_region
    _
  $region13: #{gau_forward.1} parent=0 // pred_fallthru
    _
  // Predicated region
  $region14: #{gau_forward.1} parent=0 // pred_check
    _
  $region15: #{gau_forward.1} parent=0 // pred_check_branch
    %18 = sbr.rel (0) target = $region17
  $region16: #{gau_forward.1} parent=0 // pred_region
    _
  $region17: #{gau_forward.1} parent=0 // pred_fallthru
    _
  // Predicated region
  $region18: #{gau_forward.1} parent=0 // pred_check
    _
  $region19: #{gau_forward.1} parent=0 // pred_check_branch
    %20 = sbr.rel (0) target = $region21
  $region20: #{gau_forward.1} parent=0 // pred_region
    _
  $region21: #{gau_forward.1} parent=0 // pred_fallthru
    _
  // Predicated region
  $region22: #{gau_forward.1} parent=0 // pred_check
    _
  $region23: #{gau_forward.1} parent=0 // pred_check_branch
    %22 = sbr.rel (0) target = $region25
  $region24: #{gau_forward.1} parent=0 // pred_region
    _
  $region25: #{gau_forward.1} parent=0 // pred_fallthru
    _
  %v23 = vld [vmem:[%s5] sm:$0xff]
  %v24 = vld [vmem:[%s5 + $0x8] sm:$0xff]
  %v25 = vld [vmem:[%s5 + $0x10] sm:$0xff]
  %v26 = vld [vmem:[%s5 + $0x18] sm:$0xff]
  %v27 = vld [vmem:[%s5 + $0x20] sm:$0xff]
  %v28 = vld [vmem:[%s5 + $0x28] sm:$0xff]
  %v29 = vld [vmem:[%s5 + $0x30] sm:$0xff]
  %v30 = vld [vmem:[%s5 + $0x38] sm:$0xff]
  %v31 = vld [vmem:[%s5 + $0x40] sm:$0xff]
  %v32 = vld [vmem:[%s5 + $0x48] sm:$0xff]
  %v33 = vld [vmem:[%s5 + $0x50] sm:$0xff]
  %v34 = vld [vmem:[%s5 + $0x58] sm:$0xff]
  %v35 = vld [vmem:[%s5 + $0x60] sm:$0xff]
  %v36 = vld [vmem:[%s5 + $0x68] sm:$0xff]
  %v37 = vld [vmem:[%s5 + $0x70] sm:$0xff]
  %v38 = vld [vmem:[%s5 + $0x78] sm:$0xff]
  %v39 = vld [vmem:[%s0] sm:$0xff]
  %v40 = vld [vmem:[%s0 + $0x8] sm:$0xff]
  %v41 = vld [vmem:[%s0 + $0x10] sm:$0xff]
  %v42 = vld [vmem:[%s0 + $0x18] sm:$0xff]
  %v43 = vld [vmem:[%s0 + $0x20] sm:$0xff]
  %v44 = vld [vmem:[%s0 + $0x28] sm:$0xff]
  %v45 = vld [vmem:[%s0 + $0x30] sm:$0xff]
  %v46 = vld [vmem:[%s0 + $0x38] sm:$0xff]
  %v47 = vld [vmem:[%s1] sm:$0xff]
  %v48 = vld [vmem:[%s1 + $0x8] sm:$0xff]
  %v49 = vld [vmem:[%s1 + $0x10] sm:$0xff]
  %v50 = vld [vmem:[%s1 + $0x18] sm:$0xff]
  %v51 = vld [vmem:[%s1 + $0x20] sm:$0xff]
  %v52 = vld [vmem:[%s1 + $0x28] sm:$0xff]
  %v53 = vld [vmem:[%s1 + $0x30] sm:$0xff]
  %v54 = vld [vmem:[%s1 + $0x38] sm:$0xff]
  %v55 = vld [vmem:[%s1 + $0x40] sm:$0xff]
  %v56 = vld [vmem:[%s1 + $0x48] sm:$0xff]
  %v57 = vld [vmem:[%s1 + $0x50] sm:$0xff]
  %v58 = vld [vmem:[%s1 + $0x58] sm:$0xff]
  %v59 = vld [vmem:[%s1 + $0x60] sm:$0xff]
  %v60 = vld [vmem:[%s1 + $0x68] sm:$0xff]
  %v61 = vld [vmem:[%s1 + $0x70] sm:$0xff]
  %v62 = vld [vmem:[%s1 + $0x78] sm:$0xff]
  %v63 = vld [vmem:[%s2] sm:$0xff]
  %v64 = vld [vmem:[%s2 + $0x8] sm:$0xff]
  %v65 = vld [vmem:[%s2 + $0x10] sm:$0xff]
  %v66 = vld [vmem:[%s2 + $0x18] sm:$0xff]
  %v67 = vld [vmem:[%s2 + $0x20] sm:$0xff]
  %v68 = vld [vmem:[%s2 + $0x28] sm:$0xff]
  %v69 = vld [vmem:[%s2 + $0x30] sm:$0xff]
  %v70 = vld [vmem:[%s2 + $0x38] sm:$0xff]
  %v71 = vld [vmem:[%s2 + $0x40] sm:$0xff]
  %v72 = vld [vmem:[%s2 + $0x48] sm:$0xff]
  %v73 = vld [vmem:[%s2 + $0x50] sm:$0xff]
  %v74 = vld [vmem:[%s2 + $0x58] sm:$0xff]
  %v75 = vld [vmem:[%s2 + $0x60] sm:$0xff]
  %v76 = vld [vmem:[%s2 + $0x68] sm:$0xff]
  %v77 = vld [vmem:[%s2 + $0x70] sm:$0xff]
  %v78 = vld [vmem:[%s2 + $0x78] sm:$0xff]
  %80 = vset.pattern.permute.xlu0 32
  %81 = vperm.xlu0 %80, %v23
  %v82 = vpop.permute.xlu0 %81
  %85 = vset.pattern.permute.xlu0 32
  %86 = vperm.xlu0 %85, %v24
  %v87 = vpop.permute.xlu0 %86
  %90 = vset.pattern.permute.xlu0 32
  %91 = vperm.xlu0 %90, %v25
  %v92 = vpop.permute.xlu0 %91
  %95 = vset.pattern.permute.xlu0 32
  %96 = vperm.xlu0 %95, %v26
  %v97 = vpop.permute.xlu0 %96
  %vm99 = vcmask 261120
  %v100 = vsel %vm99, %v23, 0
  %v102 = vsel %vm99, %v24, 0
  %v104 = vsel %vm99, %v25, 0
  %v106 = vsel %vm99, %v26, 0
  %108 = vmatprep.subr.mxu0 0.0
  %109 = vmatpush1.msra.mxu0 %v39
  %110 = vmatprep.subr.mxu0 0.0
  %111 = vmatpush1.msra.mxu0 %v40
  %112 = vmatprep.subr.mxu0 0.0
  %113 = vmatpush1.msra.mxu0 %v41
  %114 = vmatprep.subr.mxu0 0.0
  %115 = vmatpush1.msra.mxu0 %v42
  %116 = vmatprep.subr.mxu0 0.0
  %117 = vmatpush1.msra.mxu0 0.0
  %118 = vmatprep.subr.mxu0 0.0
  %119 = vmatpush1.msra.mxu0 0.0
  %120 = vmatprep.subr.mxu0 0.0
  %121 = vmatpush1.msra.mxu0 0.0
  %122 = vmatprep.subr.mxu0 0.0
  %123 = vmatpush1.msra.mxu0 0.0
  %124 = vmatprep.subr.mxu0 0.0
  %125 = vmatpush1.msra.mxu0 0.0
  %126 = vmatprep.subr.mxu0 0.0
  %127 = vmatpush1.msra.mxu0 0.0
  %128 = vmatprep.subr.mxu0 0.0
  %129 = vmatpush1.msra.mxu0 0.0
  %130 = vmatprep.subr.mxu0 0.0
  %131 = vmatpush1.msra.mxu0 0.0
  %132 = vmatprep.subr.mxu0 0.0
  %133 = vmatpush1.msra.mxu0 0.0
  %134 = vmatprep.subr.mxu0 0.0
  %135 = vmatpush1.msra.mxu0 0.0
  %136 = vmatprep.subr.mxu0 0.0
  %137 = vmatpush1.msra.mxu0 0.0
  %138 = vmatprep.subr.mxu0 0.0
  %139 = vmatpush1.msra.mxu0 0.0
  %140 = vmatprep.subr.mxu0 0.0
  %141 = vmatpush1.msra.mxu0 0.0
  %142 = vmatprep.subr.mxu0 0.0
  %143 = vmatpush1.msra.mxu0 0.0
  %144 = vmatprep.subr.mxu0 0.0
  %145 = vmatpush1.msra.mxu0 0.0
  %146 = vmatprep.subr.mxu0 0.0
  %147 = vmatpush1.msra.mxu0 0.0
  %148 = vmatprep.subr.mxu0 0.0
  %149 = vmatpush1.msra.mxu0 0.0
  %150 = vmatprep.subr.mxu0 0.0
  %151 = vmatpush1.msra.mxu0 0.0
  %152 = vmatprep.subr.mxu0 0.0
  %153 = vmatpush1.msra.mxu0 0.0
  %154 = vmatprep.subr.mxu0 0.0
  %155 = vmatpush1.msra.mxu0 0.0
  %156 = vmatprep.subr.mxu0 0.0
  %157 = vmatpush1.msra.mxu0 0.0
  %158 = vmatprep.subr.mxu0 0.0
  %159 = vmatpush1.msra.mxu0 0.0
  %160 = vmatprep.subr.mxu0 0.0
  %161 = vmatpush1.msra.mxu0 0.0
  %162 = vmatprep.subr.mxu0 0.0
  %163 = vmatpush1.msra.mxu0 0.0
  %164 = vmatprep.subr.mxu0 0.0
  %165 = vmatpush1.msra.mxu0 0.0
  %166 = vmatprep.subr.mxu0 0.0
  %167 = vmatpush1.msra.mxu0 0.0
  %168 = vmatprep.subr.mxu0 0.0
  %169 = vmatpush1.msra.mxu0 0.0
  %170 = vmatprep.subr.mxu0 0.0
  %171 = vmatpush1.msra.mxu0 0.0
  %172 = vmatprep.mubr.f32.mxu0 0.0
  %173 = vmatmul.mubr.f32.gmra.mrb[0].mxu0 %v100
  %v174 = vpop.f32.mrb[0].mxu0
  %v175 = vadd.f32 %v82, %v174
  %v176 = vpop.f32.mrb[0].mxu0
  %177 = vmatprep.mubr.f32.mxu0 0.0
  %178 = vmatmul.mubr.f32.gmra.mrb[0].mxu0 %v102
  %v179 = vpop.f32.mrb[0].mxu0
  %v180 = vadd.f32 %v87, %v179
  %v181 = vpop.f32.mrb[0].mxu0
  %182 = vmatprep.mubr.f32.mxu0 0.0
  %183 = vmatmul.mubr.f32.gmra.mrb[0].mxu0 %v104
  %v184 = vpop.f32.mrb[0].mxu0
  %v185 = vadd.f32 %v92, %v184
  %v186 = vpop.f32.mrb[0].mxu0
  %187 = vmatprep.mubr.f32.mxu0 0.0
  %188 = vmatmul.mubr.f32.gmra.mrb[0].mxu0 %v106
  %v189 = vpop.f32.mrb[0].mxu0
  %v190 = vadd.f32 %v97, %v189
  %v191 = vpop.f32.mrb[0].mxu0
  %192 = vdwg.mxu0
  %193 = vmatprep.subr.mxu0 0.0
  %194 = vmatpush1.msra.mxu0 %v43
  %195 = vmatprep.subr.mxu0 0.0
  %196 = vmatpush1.msra.mxu0 %v44
  %197 = vmatprep.subr.mxu0 0.0
  %198 = vmatpush1.msra.mxu0 %v45
  %199 = vmatprep.subr.mxu0 0.0
  %200 = vmatpush1.msra.mxu0 %v46
  %201 = vmatprep.subr.mxu0 0.0
  %202 = vmatpush1.msra.mxu0 0.0
  %203 = vmatprep.subr.mxu0 0.0
  %204 = vmatpush1.msra.mxu0 0.0
  %205 = vmatprep.subr.mxu0 0.0
  %206 = vmatpush1.msra.mxu0 0.0
  %207 = vmatprep.subr.mxu0 0.0
  %208 = vmatpush1.msra.mxu0 0.0
  %209 = vmatprep.subr.mxu0 0.0
  %210 = vmatpush1.msra.mxu0 0.0
  %211 = vmatprep.subr.mxu0 0.0
  %212 = vmatpush1.msra.mxu0 0.0
  %213 = vmatprep.subr.mxu0 0.0
  %214 = vmatpush1.msra.mxu0 0.0
  %215 = vmatprep.subr.mxu0 0.0
  %216 = vmatpush1.msra.mxu0 0.0
  %217 = vmatprep.subr.mxu0 0.0
  %218 = vmatpush1.msra.mxu0 0.0
  %219 = vmatprep.subr.mxu0 0.0
  %220 = vmatpush1.msra.mxu0 0.0
  %221 = vmatprep.subr.mxu0 0.0
  %222 = vmatpush1.msra.mxu0 0.0
  %223 = vmatprep.subr.mxu0 0.0
  %224 = vmatpush1.msra.mxu0 0.0
  %225 = vmatprep.subr.mxu0 0.0
  %226 = vmatpush1.msra.mxu0 0.0
  %227 = vmatprep.subr.mxu0 0.0
  %228 = vmatpush1.msra.mxu0 0.0
  %229 = vmatprep.subr.mxu0 0.0
  %230 = vmatpush1.msra.mxu0 0.0
  %231 = vmatprep.subr.mxu0 0.0
  %232 = vmatpush1.msra.mxu0 0.0
  %233 = vmatprep.subr.mxu0 0.0
  %234 = vmatpush1.msra.mxu0 0.0
  %235 = vmatprep.subr.mxu0 0.0
  %236 = vmatpush1.msra.mxu0 0.0
  %237 = vmatprep.subr.mxu0 0.0
  %238 = vmatpush1.msra.mxu0 0.0
  %239 = vmatprep.subr.mxu0 0.0
  %240 = vmatpush1.msra.mxu0 0.0
  %241 = vmatprep.subr.mxu0 0.0
  %242 = vmatpush1.msra.mxu0 0.0
  %243 = vmatprep.subr.mxu0 0.0
  %244 = vmatpush1.msra.mxu0 0.0
  %245 = vmatprep.subr.mxu0 0.0
  %246 = vmatpush1.msra.mxu0 0.0
  %247 = vmatprep.subr.mxu0 0.0
  %248 = vmatpush1.msra.mxu0 0.0
  %249 = vmatprep.subr.mxu0 0.0
  %250 = vmatpush1.msra.mxu0 0.0
  %251 = vmatprep.subr.mxu0 0.0
  %252 = vmatpush1.msra.mxu0 0.0
  %253 = vmatprep.subr.mxu0 0.0
  %254 = vmatpush1.msra.mxu0 0.0
  %255 = vmatprep.subr.mxu0 0.0
  %256 = vmatpush1.msra.mxu0 0.0
  %257 = vmatprep.mubr.f32.mxu0 0.0
  %258 = vmatmul.mubr.f32.gmra.mrb[0].mxu0 %v100
  %v259 = vpop.f32.mrb[0].mxu0
  %v260 = vadd.f32 %v82, %v259
  %v261 = vpop.f32.mrb[0].mxu0
  %262 = vmatprep.mubr.f32.mxu0 0.0
  %263 = vmatmul.mubr.f32.gmra.mrb[0].mxu0 %v102
  %v264 = vpop.f32.mrb[0].mxu0
  %v265 = vadd.f32 %v87, %v264
  %v266 = vpop.f32.mrb[0].mxu0
  %267 = vmatprep.mubr.f32.mxu0 0.0
  %268 = vmatmul.mubr.f32.gmra.mrb[0].mxu0 %v104
  %v269 = vpop.f32.mrb[0].mxu0
  %v270 = vadd.f32 %v92, %v269
  %v271 = vpop.f32.mrb[0].mxu0
  %272 = vmatprep.mubr.f32.mxu0 0.0
  %273 = vmatmul.mubr.f32.gmra.mrb[0].mxu0 %v106
  %v274 = vpop.f32.mrb[0].mxu0
  %v275 = vadd.f32 %v97, %v274
  %v276 = vpop.f32.mrb[0].mxu0
  %277 = vdwg.mxu0
  %279 = vset.pattern.permute.xlu0 32
  %280 = vperm.xlu0 %279, %v27
  %v281 = vpop.permute.xlu0 %280
  %284 = vset.pattern.permute.xlu0 32
  %285 = vperm.xlu0 %284, %v28
  %v286 = vpop.permute.xlu0 %285
  %289 = vset.pattern.permute.xlu0 32
  %290 = vperm.xlu0 %289, %v29
  %v291 = vpop.permute.xlu0 %290
  %294 = vset.pattern.permute.xlu0 32
  %295 = vperm.xlu0 %294, %v30
  %v296 = vpop.permute.xlu0 %295
  %v298 = vsel %vm99, %v27, 0
  %v300 = vsel %vm99, %v28, 0
  %v302 = vsel %vm99, %v29, 0
  %v304 = vsel %vm99, %v30, 0
  %306 = vmatprep.subr.mxu0 0.0
  %307 = vmatpush1.msra.mxu0 %v47
  %308 = vmatprep.subr.mxu0 0.0
  %309 = vmatpush1.msra.mxu0 %v48
  %310 = vmatprep.subr.mxu0 0.0
  %311 = vmatpush1.msra.mxu0 %v49
  %312 = vmatprep.subr.mxu0 0.0
  %313 = vmatpush1.msra.mxu0 %v50
  %314 = vmatprep.subr.mxu0 0.0
  %315 = vmatpush1.msra.mxu0 0.0
  %316 = vmatprep.subr.mxu0 0.0
  %317 = vmatpush1.msra.mxu0 0.0
  %318 = vmatprep.subr.mxu0 0.0
  %319 = vmatpush1.msra.mxu0 0.0
  %320 = vmatprep.subr.mxu0 0.0
  %321 = vmatpush1.msra.mxu0 0.0
  %322 = vmatprep.subr.mxu0 0.0
  %323 = vmatpush1.msra.mxu0 0.0
  %324 = vmatprep.subr.mxu0 0.0
  %325 = vmatpush1.msra.mxu0 0.0
  %326 = vmatprep.subr.mxu0 0.0
  %327 = vmatpush1.msra.mxu0 0.0
  %328 = vmatprep.subr.mxu0 0.0
  %329 = vmatpush1.msra.mxu0 0.0
  %330 = vmatprep.subr.mxu0 0.0
  %331 = vmatpush1.msra.mxu0 0.0
  %332 = vmatprep.subr.mxu0 0.0
  %333 = vmatpush1.msra.mxu0 0.0
  %334 = vmatprep.subr.mxu0 0.0
  %335 = vmatpush1.msra.mxu0 0.0
  %336 = vmatprep.subr.mxu0 0.0
  %337 = vmatpush1.msra.mxu0 0.0
  %338 = vmatprep.subr.mxu0 0.0
  %339 = vmatpush1.msra.mxu0 0.0
  %340 = vmatprep.subr.mxu0 0.0
  %341 = vmatpush1.msra.mxu0 0.0
  %342 = vmatprep.subr.mxu0 0.0
  %343 = vmatpush1.msra.mxu0 0.0
  %344 = vmatprep.subr.mxu0 0.0
  %345 = vmatpush1.msra.mxu0 0.0
  %346 = vmatprep.subr.mxu0 0.0
  %347 = vmatpush1.msra.mxu0 0.0
  %348 = vmatprep.subr.mxu0 0.0
  %349 = vmatpush1.msra.mxu0 0.0
  %350 = vmatprep.subr.mxu0 0.0
  %351 = vmatpush1.msra.mxu0 0.0
  %352 = vmatprep.subr.mxu0 0.0
  %353 = vmatpush1.msra.mxu0 0.0
  %354 = vmatprep.subr.mxu0 0.0
  %355 = vmatpush1.msra.mxu0 0.0
  %356 = vmatprep.subr.mxu0 0.0
  %357 = vmatpush1.msra.mxu0 0.0
  %358 = vmatprep.subr.mxu0 0.0
  %359 = vmatpush1.msra.mxu0 0.0
  %360 = vmatprep.subr.mxu0 0.0
  %361 = vmatpush1.msra.mxu0 0.0
  %362 = vmatprep.subr.mxu0 0.0
  %363 = vmatpush1.msra.mxu0 0.0
  %364 = vmatprep.subr.mxu0 0.0
  %365 = vmatpush1.msra.mxu0 0.0
  %366 = vmatprep.subr.mxu0 0.0
  %367 = vmatpush1.msra.mxu0 0.0
  %368 = vmatprep.subr.mxu0 0.0
  %369 = vmatpush1.msra.mxu0 0.0
  %370 = vmatprep.mubr.f32.mxu0 0.0
  %371 = vmatmul.mubr.f32.gmra.mrb[0].mxu0 %v298
  %v372 = vpop.f32.mrb[0].mxu0
  %v373 = vadd.f32 %v281, %v372
  %v374 = vpop.f32.mrb[0].mxu0
  %375 = vmatprep.mubr.f32.mxu0 0.0
  %376 = vmatmul.mubr.f32.gmra.mrb[0].mxu0 %v300
  %v377 = vpop.f32.mrb[0].mxu0
  %v378 = vadd.f32 %v286, %v377
  %v379 = vpop.f32.mrb[0].mxu0
  %380 = vmatprep.mubr.f32.mxu0 0.0
  %381 = vmatmul.mubr.f32.gmra.mrb[0].mxu0 %v302
  %v382 = vpop.f32.mrb[0].mxu0
  %v383 = vadd.f32 %v291, %v382
  %v384 = vpop.f32.mrb[0].mxu0
  %385 = vmatprep.mubr.f32.mxu0 0.0
  %386 = vmatmul.mubr.f32.gmra.mrb[0].mxu0 %v304
  %v387 = vpop.f32.mrb[0].mxu0
  %v388 = vadd.f32 %v296, %v387
  %v389 = vpop.f32.mrb[0].mxu0
  %390 = vdwg.mxu0
  %391 = vmatprep.subr.mxu0 0.0
  %392 = vmatpush1.msra.mxu0 %v51
  %393 = vmatprep.subr.mxu0 0.0
  %394 = vmatpush1.msra.mxu0 %v52
  %395 = vmatprep.subr.mxu0 0.0
  %396 = vmatpush1.msra.mxu0 %v53
  %397 = vmatprep.subr.mxu0 0.0
  %398 = vmatpush1.msra.mxu0 %v54
  %399 = vmatprep.subr.mxu0 0.0
  %400 = vmatpush1.msra.mxu0 0.0
  %401 = vmatprep.subr.mxu0 0.0
  %402 = vmatpush1.msra.mxu0 0.0
  %403 = vmatprep.subr.mxu0 0.0
  %404 = vmatpush1.msra.mxu0 0.0
  %405 = vmatprep.subr.mxu0 0.0
  %406 = vmatpush1.msra.mxu0 0.0
  %407 = vmatprep.subr.mxu0 0.0
  %408 = vmatpush1.msra.mxu0 0.0
  %409 = vmatprep.subr.mxu0 0.0
  %410 = vmatpush1.msra.mxu0 0.0
  %411 = vmatprep.subr.mxu0 0.0
  %412 = vmatpush1.msra.mxu0 0.0
  %413 = vmatprep.subr.mxu0 0.0
  %414 = vmatpush1.msra.mxu0 0.0
  %415 = vmatprep.subr.mxu0 0.0
  %416 = vmatpush1.msra.mxu0 0.0
  %417 = vmatprep.subr.mxu0 0.0
  %418 = vmatpush1.msra.mxu0 0.0
  %419 = vmatprep.subr.mxu0 0.0
  %420 = vmatpush1.msra.mxu0 0.0
  %421 = vmatprep.subr.mxu0 0.0
  %422 = vmatpush1.msra.mxu0 0.0
  %423 = vmatprep.subr.mxu0 0.0
  %424 = vmatpush1.msra.mxu0 0.0
  %425 = vmatprep.subr.mxu0 0.0
  %426 = vmatpush1.msra.mxu0 0.0
  %427 = vmatprep.subr.mxu0 0.0
  %428 = vmatpush1.msra.mxu0 0.0
  %429 = vmatprep.subr.mxu0 0.0
  %430 = vmatpush1.msra.mxu0 0.0
  %431 = vmatprep.subr.mxu0 0.0
  %432 = vmatpush1.msra.mxu0 0.0
  %433 = vmatprep.subr.mxu0 0.0
  %434 = vmatpush1.msra.mxu0 0.0
  %435 = vmatprep.subr.mxu0 0.0
  %436 = vmatpush1.msra.mxu0 0.0
  %437 = vmatprep.subr.mxu0 0.0
  %438 = vmatpush1.msra.mxu0 0.0
  %439 = vmatprep.subr.mxu0 0.0
  %440 = vmatpush1.msra.mxu0 0.0
  %441 = vmatprep.subr.mxu0 0.0
  %442 = vmatpush1.msra.mxu0 0.0
  %443 = vmatprep.subr.mxu0 0.0
  %444 = vmatpush1.msra.mxu0 0.0
  %445 = vmatprep.subr.mxu0 0.0
  %446 = vmatpush1.msra.mxu0 0.0
  %447 = vmatprep.subr.mxu0 0.0
  %448 = vmatpush1.msra.mxu0 0.0
  %449 = vmatprep.subr.mxu0 0.0
  %450 = vmatpush1.msra.mxu0 0.0
  %451 = vmatprep.subr.mxu0 0.0
  %452 = vmatpush1.msra.mxu0 0.0
  %453 = vmatprep.subr.mxu0 0.0
  %454 = vmatpush1.msra.mxu0 0.0
  %455 = vmatprep.mubr.f32.mxu0 0.0
  %456 = vmatmul.mubr.f32.gmra.mrb[0].mxu0 %v298
  %v457 = vpop.f32.mrb[0].mxu0
  %v458 = vadd.f32 %v281, %v457
  %v459 = vpop.f32.mrb[0].mxu0
  %460 = vmatprep.mubr.f32.mxu0 0.0
  %461 = vmatmul.mubr.f32.gmra.mrb[0].mxu0 %v300
  %v462 = vpop.f32.mrb[0].mxu0
  %v463 = vadd.f32 %v286, %v462
  %v464 = vpop.f32.mrb[0].mxu0
  %465 = vmatprep.mubr.f32.mxu0 0.0
  %466 = vmatmul.mubr.f32.gmra.mrb[0].mxu0 %v302
  %v467 = vpop.f32.mrb[0].mxu0
  %v468 = vadd.f32 %v291, %v467
  %v469 = vpop.f32.mrb[0].mxu0
  %470 = vmatprep.mubr.f32.mxu0 0.0
  %471 = vmatmul.mubr.f32.gmra.mrb[0].mxu0 %v304
  %v472 = vpop.f32.mrb[0].mxu0
  %v473 = vadd.f32 %v296, %v472
  %v474 = vpop.f32.mrb[0].mxu0
  %475 = vdwg.mxu0
  %476 = vmatprep.subr.mxu0 0.0
  %477 = vmatpush1.msra.mxu0 %v55
  %478 = vmatprep.subr.mxu0 0.0
  %479 = vmatpush1.msra.mxu0 %v56
  %480 = vmatprep.subr.mxu0 0.0
  %481 = vmatpush1.msra.mxu0 %v57
  %482 = vmatprep.subr.mxu0 0.0
  %483 = vmatpush1.msra.mxu0 %v58
  %484 = vmatprep.subr.mxu0 0.0
  %485 = vmatpush1.msra.mxu0 0.0
  %486 = vmatprep.subr.mxu0 0.0
  %487 = vmatpush1.msra.mxu0 0.0
  %488 = vmatprep.subr.mxu0 0.0
  %489 = vmatpush1.msra.mxu0 0.0
  %490 = vmatprep.subr.mxu0 0.0
  %491 = vmatpush1.msra.mxu0 0.0
  %492 = vmatprep.subr.mxu0 0.0
  %493 = vmatpush1.msra.mxu0 0.0
  %494 = vmatprep.subr.mxu0 0.0
  %495 = vmatpush1.msra.mxu0 0.0
  %496 = vmatprep.subr.mxu0 0.0
  %497 = vmatpush1.msra.mxu0 0.0
  %498 = vmatprep.subr.mxu0 0.0
  %499 = vmatpush1.msra.mxu0 0.0
  %500 = vmatprep.subr.mxu0 0.0
  %501 = vmatpush1.msra.mxu0 0.0
  %502 = vmatprep.subr.mxu0 0.0
  %503 = vmatpush1.msra.mxu0 0.0
  %504 = vmatprep.subr.mxu0 0.0
  %505 = vmatpush1.msra.mxu0 0.0
  %506 = vmatprep.subr.mxu0 0.0
  %507 = vmatpush1.msra.mxu0 0.0
  %508 = vmatprep.subr.mxu0 0.0
  %509 = vmatpush1.msra.mxu0 0.0
  %510 = vmatprep.subr.mxu0 0.0
  %511 = vmatpush1.msra.mxu0 0.0
  %512 = vmatprep.subr.mxu0 0.0
  %513 = vmatpush1.msra.mxu0 0.0
  %514 = vmatprep.subr.mxu0 0.0
  %515 = vmatpush1.msra.mxu0 0.0
  %516 = vmatprep.subr.mxu0 0.0
  %517 = vmatpush1.msra.mxu0 0.0
  %518 = vmatprep.subr.mxu0 0.0
  %519 = vmatpush1.msra.mxu0 0.0
  %520 = vmatprep.subr.mxu0 0.0
  %521 = vmatpush1.msra.mxu0 0.0
  %522 = vmatprep.subr.mxu0 0.0
  %523 = vmatpush1.msra.mxu0 0.0
  %524 = vmatprep.subr.mxu0 0.0
  %525 = vmatpush1.msra.mxu0 0.0
  %526 = vmatprep.subr.mxu0 0.0
  %527 = vmatpush1.msra.mxu0 0.0
  %528 = vmatprep.subr.mxu0 0.0
  %529 = vmatpush1.msra.mxu0 0.0
  %530 = vmatprep.subr.mxu0 0.0
  %531 = vmatpush1.msra.mxu0 0.0
  %532 = vmatprep.subr.mxu0 0.0
  %533 = vmatpush1.msra.mxu0 0.0
  %534 = vmatprep.subr.mxu0 0.0
  %535 = vmatpush1.msra.mxu0 0.0
  %536 = vmatprep.subr.mxu0 0.0
  %537 = vmatpush1.msra.mxu0 0.0
  %538 = vmatprep.subr.mxu0 0.0
  %539 = vmatpush1.msra.mxu0 0.0
  %540 = vmatprep.mubr.f32.mxu0 0.0
  %541 = vmatmul.mubr.f32.gmra.mrb[0].mxu0 %v298
  %v542 = vpop.f32.mrb[0].mxu0
  %v543 = vadd.f32 %v281, %v542
  %v544 = vpop.f32.mrb[0].mxu0
  %545 = vmatprep.mubr.f32.mxu0 0.0
  %546 = vmatmul.mubr.f32.gmra.mrb[0].mxu0 %v300
  %v547 = vpop.f32.mrb[0].mxu0
  %v548 = vadd.f32 %v286, %v547
  %v549 = vpop.f32.mrb[0].mxu0
  %550 = vmatprep.mubr.f32.mxu0 0.0
  %551 = vmatmul.mubr.f32.gmra.mrb[0].mxu0 %v302
  %v552 = vpop.f32.mrb[0].mxu0
  %v553 = vadd.f32 %v291, %v552
  %v554 = vpop.f32.mrb[0].mxu0
  %555 = vmatprep.mubr.f32.mxu0 0.0
  %556 = vmatmul.mubr.f32.gmra.mrb[0].mxu0 %v304
  %v557 = vpop.f32.mrb[0].mxu0
  %v558 = vadd.f32 %v296, %v557
  %v559 = vpop.f32.mrb[0].mxu0
  %560 = vdwg.mxu0
  %561 = vmatprep.subr.mxu0 0.0
  %562 = vmatpush1.msra.mxu0 %v59
  %563 = vmatprep.subr.mxu0 0.0
  %564 = vmatpush1.msra.mxu0 %v60
  %565 = vmatprep.subr.mxu0 0.0
  %566 = vmatpush1.msra.mxu0 %v61
  %567 = vmatprep.subr.mxu0 0.0
  %568 = vmatpush1.msra.mxu0 %v62
  %569 = vmatprep.subr.mxu0 0.0
  %570 = vmatpush1.msra.mxu0 0.0
  %571 = vmatprep.subr.mxu0 0.0
  %572 = vmatpush1.msra.mxu0 0.0
  %573 = vmatprep.subr.mxu0 0.0
  %574 = vmatpush1.msra.mxu0 0.0
  %575 = vmatprep.subr.mxu0 0.0
  %576 = vmatpush1.msra.mxu0 0.0
  %577 = vmatprep.subr.mxu0 0.0
  %578 = vmatpush1.msra.mxu0 0.0
  %579 = vmatprep.subr.mxu0 0.0
  %580 = vmatpush1.msra.mxu0 0.0
  %581 = vmatprep.subr.mxu0 0.0
  %582 = vmatpush1.msra.mxu0 0.0
  %583 = vmatprep.subr.mxu0 0.0
  %584 = vmatpush1.msra.mxu0 0.0
  %585 = vmatprep.subr.mxu0 0.0
  %586 = vmatpush1.msra.mxu0 0.0
  %587 = vmatprep.subr.mxu0 0.0
  %588 = vmatpush1.msra.mxu0 0.0
  %589 = vmatprep.subr.mxu0 0.0
  %590 = vmatpush1.msra.mxu0 0.0
  %591 = vmatprep.subr.mxu0 0.0
  %592 = vmatpush1.msra.mxu0 0.0
  %593 = vmatprep.subr.mxu0 0.0
  %594 = vmatpush1.msra.mxu0 0.0
  %595 = vmatprep.subr.mxu0 0.0
  %596 = vmatpush1.msra.mxu0 0.0
  %597 = vmatprep.subr.mxu0 0.0
  %598 = vmatpush1.msra.mxu0 0.0
  %599 = vmatprep.subr.mxu0 0.0
  %600 = vmatpush1.msra.mxu0 0.0
  %601 = vmatprep.subr.mxu0 0.0
  %602 = vmatpush1.msra.mxu0 0.0
  %603 = vmatprep.subr.mxu0 0.0
  %604 = vmatpush1.msra.mxu0 0.0
  %605 = vmatprep.subr.mxu0 0.0
  %606 = vmatpush1.msra.mxu0 0.0
  %607 = vmatprep.subr.mxu0 0.0
  %608 = vmatpush1.msra.mxu0 0.0
  %609 = vmatprep.subr.mxu0 0.0
  %610 = vmatpush1.msra.mxu0 0.0
  %611 = vmatprep.subr.mxu0 0.0
  %612 = vmatpush1.msra.mxu0 0.0
  %613 = vmatprep.subr.mxu0 0.0
  %614 = vmatpush1.msra.mxu0 0.0
  %615 = vmatprep.subr.mxu0 0.0
  %616 = vmatpush1.msra.mxu0 0.0
  %617 = vmatprep.subr.mxu0 0.0
  %618 = vmatpush1.msra.mxu0 0.0
  %619 = vmatprep.subr.mxu0 0.0
  %620 = vmatpush1.msra.mxu0 0.0
  %621 = vmatprep.subr.mxu0 0.0
  %622 = vmatpush1.msra.mxu0 0.0
  %623 = vmatprep.subr.mxu0 0.0
  %624 = vmatpush1.msra.mxu0 0.0
  %625 = vmatprep.mubr.f32.mxu0 0.0
  %626 = vmatmul.mubr.f32.gmra.mrb[0].mxu0 %v298
  %v627 = vpop.f32.mrb[0].mxu0
  %v628 = vadd.f32 %v281, %v627
  %v629 = vpop.f32.mrb[0].mxu0
  %630 = vmatprep.mubr.f32.mxu0 0.0
  %631 = vmatmul.mubr.f32.gmra.mrb[0].mxu0 %v300
  %v632 = vpop.f32.mrb[0].mxu0
  %v633 = vadd.f32 %v286, %v632
  %v634 = vpop.f32.mrb[0].mxu0
  %635 = vmatprep.mubr.f32.mxu0 0.0
  %636 = vmatmul.mubr.f32.gmra.mrb[0].mxu0 %v302
  %v637 = vpop.f32.mrb[0].mxu0
  %v638 = vadd.f32 %v291, %v637
  %v639 = vpop.f32.mrb[0].mxu0
  %640 = vmatprep.mubr.f32.mxu0 0.0
  %641 = vmatmul.mubr.f32.gmra.mrb[0].mxu0 %v304
  %v642 = vpop.f32.mrb[0].mxu0
  %v643 = vadd.f32 %v296, %v642
  %v644 = vpop.f32.mrb[0].mxu0
  %645 = vdwg.mxu0
  %v646 = vlaneseq
  %v647 = vshrl.u32 %v646, 7
  %v648 = vadd.s32 %v647, 8
  %v649 = vlaneseq
  %v650 = vand.u32 %v649, 127
  %vm651 = vcmp.eq.s32.totalorder %v647, %v650
  %vm652 = vcmp.eq.s32.totalorder %v648, %v650
  %v653 = vsel %vm651, 1, 0
  %v654 = vsel %vm652, 1, 0
  %v655 = vcvt.s32.f32 %v653
  %v656 = vcvt.s32.f32 %v654
  %vm657 = vcmask 130048
  %v659 = vsel %vm657, %v655, 0
  %v662 = vsel %vm657, %v656, 0
  %v665 = vsel %vm657, %v175, 0
  %v668 = vsel %vm657, %v180, 0
  %v671 = vsel %vm657, %v185, 0
  %v674 = vsel %vm657, %v190, 0
  %676 = vmatprep.subr.mxu0 0.0
  %677 = vmatpush1.xpose.msra.mxu0 %v665
  %678 = vmatprep.subr.mxu0 0.0
  %679 = vmatpush1.xpose.msra.mxu0 %v668
  %680 = vmatprep.subr.mxu0 0.0
  %681 = vmatpush1.xpose.msra.mxu0 %v671
  %682 = vmatprep.subr.mxu0 0.0
  %683 = vmatpush1.xpose.msra.mxu0 %v674
  %684 = vmatprep.subr.mxu0 0.0
  %685 = vmatpush1.xpose.msra.mxu0 0.0
  %686 = vmatprep.subr.mxu0 0.0
  %687 = vmatpush1.xpose.msra.mxu0 0.0
  %688 = vmatprep.subr.mxu0 0.0
  %689 = vmatpush1.xpose.msra.mxu0 0.0
  %690 = vmatprep.subr.mxu0 0.0
  %691 = vmatpush1.xpose.msra.mxu0 0.0
  %692 = vmatprep.subr.mxu0 0.0
  %693 = vmatpush1.xpose.msra.mxu0 0.0
  %694 = vmatprep.subr.mxu0 0.0
  %695 = vmatpush1.xpose.msra.mxu0 0.0
  %696 = vmatprep.subr.mxu0 0.0
  %697 = vmatpush1.xpose.msra.mxu0 0.0
  %698 = vmatprep.subr.mxu0 0.0
  %699 = vmatpush1.xpose.msra.mxu0 0.0
  %700 = vmatprep.subr.mxu0 0.0
  %701 = vmatpush1.xpose.msra.mxu0 0.0
  %702 = vmatprep.subr.mxu0 0.0
  %703 = vmatpush1.xpose.msra.mxu0 0.0
  %704 = vmatprep.subr.mxu0 0.0
  %705 = vmatpush1.xpose.msra.mxu0 0.0
  %706 = vmatprep.subr.mxu0 0.0
  %707 = vmatpush1.xpose.msra.mxu0 0.0
  %708 = vmatprep.subr.mxu0 0.0
  %709 = vmatpush1.xpose.msra.mxu0 0.0
  %710 = vmatprep.subr.mxu0 0.0
  %711 = vmatpush1.xpose.msra.mxu0 0.0
  %712 = vmatprep.subr.mxu0 0.0
  %713 = vmatpush1.xpose.msra.mxu0 0.0
  %714 = vmatprep.subr.mxu0 0.0
  %715 = vmatpush1.xpose.msra.mxu0 0.0
  %716 = vmatprep.subr.mxu0 0.0
  %717 = vmatpush1.xpose.msra.mxu0 0.0
  %718 = vmatprep.subr.mxu0 0.0
  %719 = vmatpush1.xpose.msra.mxu0 0.0
  %720 = vmatprep.subr.mxu0 0.0
  %721 = vmatpush1.xpose.msra.mxu0 0.0
  %722 = vmatprep.subr.mxu0 0.0
  %723 = vmatpush1.xpose.msra.mxu0 0.0
  %724 = vmatprep.subr.mxu0 0.0
  %725 = vmatpush1.xpose.msra.mxu0 0.0
  %726 = vmatprep.subr.mxu0 0.0
  %727 = vmatpush1.xpose.msra.mxu0 0.0
  %728 = vmatprep.subr.mxu0 0.0
  %729 = vmatpush1.xpose.msra.mxu0 0.0
  %730 = vmatprep.subr.mxu0 0.0
  %731 = vmatpush1.xpose.msra.mxu0 0.0
  %732 = vmatprep.subr.mxu0 0.0
  %733 = vmatpush1.xpose.msra.mxu0 0.0
  %734 = vmatprep.subr.mxu0 0.0
  %735 = vmatpush1.xpose.msra.mxu0 0.0
  %736 = vmatprep.subr.mxu0 0.0
  %737 = vmatpush1.xpose.msra.mxu0 0.0
  %738 = vmatprep.subr.mxu0 0.0
  %739 = vmatpush1.xpose.msra.mxu0 0.0
  %740 = vmatprep.mubr.f32.mxu0 0.0
  %741 = vmatmul.mubr.f32.gmra.mrb[0].mxu0 %v659
  %v742 = vpop.f32.mrb[0].mxu0
  %v743 = vadd.f32 0.0, %v742
  %v744 = vpop.f32.mrb[0].mxu0
  %745 = vmatprep.mubr.f32.mxu0 0.0
  %746 = vmatmul.mubr.f32.gmra.mrb[0].mxu0 %v662
  %v747 = vpop.f32.mrb[0].mxu0
  %v748 = vadd.f32 0.0, %v747
  %v749 = vpop.f32.mrb[0].mxu0
  %750 = vdwg.mxu0
  %v752 = vsel %vm657, %v260, 0
  %v755 = vsel %vm657, %v265, 0
  %v758 = vsel %vm657, %v270, 0
  %v761 = vsel %vm657, %v275, 0
  %763 = vmatprep.subr.mxu0 0.0
  %764 = vmatpush1.xpose.msra.mxu0 %v752
  %765 = vmatprep.subr.mxu0 0.0
  %766 = vmatpush1.xpose.msra.mxu0 %v755
  %767 = vmatprep.subr.mxu0 0.0
  %768 = vmatpush1.xpose.msra.mxu0 %v758
  %769 = vmatprep.subr.mxu0 0.0
  %770 = vmatpush1.xpose.msra.mxu0 %v761
  %771 = vmatprep.subr.mxu0 0.0
  %772 = vmatpush1.xpose.msra.mxu0 0.0
  %773 = vmatprep.subr.mxu0 0.0
  %774 = vmatpush1.xpose.msra.mxu0 0.0
  %775 = vmatprep.subr.mxu0 0.0
  %776 = vmatpush1.xpose.msra.mxu0 0.0
  %777 = vmatprep.subr.mxu0 0.0
  %778 = vmatpush1.xpose.msra.mxu0 0.0
  %779 = vmatprep.subr.mxu0 0.0
  %780 = vmatpush1.xpose.msra.mxu0 0.0
  %781 = vmatprep.subr.mxu0 0.0
  %782 = vmatpush1.xpose.msra.mxu0 0.0
  %783 = vmatprep.subr.mxu0 0.0
  %784 = vmatpush1.xpose.msra.mxu0 0.0
  %785 = vmatprep.subr.mxu0 0.0
  %786 = vmatpush1.xpose.msra.mxu0 0.0
  %787 = vmatprep.subr.mxu0 0.0
  %788 = vmatpush1.xpose.msra.mxu0 0.0
  %789 = vmatprep.subr.mxu0 0.0
  %790 = vmatpush1.xpose.msra.mxu0 0.0
  %791 = vmatprep.subr.mxu0 0.0
  %792 = vmatpush1.xpose.msra.mxu0 0.0
  %793 = vmatprep.subr.mxu0 0.0
  %794 = vmatpush1.xpose.msra.mxu0 0.0
  %795 = vmatprep.subr.mxu0 0.0
  %796 = vmatpush1.xpose.msra.mxu0 0.0
  %797 = vmatprep.subr.mxu0 0.0
  %798 = vmatpush1.xpose.msra.mxu0 0.0
  %799 = vmatprep.subr.mxu0 0.0
  %800 = vmatpush1.xpose.msra.mxu0 0.0
  %801 = vmatprep.subr.mxu0 0.0
  %802 = vmatpush1.xpose.msra.mxu0 0.0
  %803 = vmatprep.subr.mxu0 0.0
  %804 = vmatpush1.xpose.msra.mxu0 0.0
  %805 = vmatprep.subr.mxu0 0.0
  %806 = vmatpush1.xpose.msra.mxu0 0.0
  %807 = vmatprep.subr.mxu0 0.0
  %808 = vmatpush1.xpose.msra.mxu0 0.0
  %809 = vmatprep.subr.mxu0 0.0
  %810 = vmatpush1.xpose.msra.mxu0 0.0
  %811 = vmatprep.subr.mxu0 0.0
  %812 = vmatpush1.xpose.msra.mxu0 0.0
  %813 = vmatprep.subr.mxu0 0.0
  %814 = vmatpush1.xpose.msra.mxu0 0.0
  %815 = vmatprep.subr.mxu0 0.0
  %816 = vmatpush1.xpose.msra.mxu0 0.0
  %817 = vmatprep.subr.mxu0 0.0
  %818 = vmatpush1.xpose.msra.mxu0 0.0
  %819 = vmatprep.subr.mxu0 0.0
  %820 = vmatpush1.xpose.msra.mxu0 0.0
  %821 = vmatprep.subr.mxu0 0.0
  %822 = vmatpush1.xpose.msra.mxu0 0.0
  %823 = vmatprep.subr.mxu0 0.0
  %824 = vmatpush1.xpose.msra.mxu0 0.0
  %825 = vmatprep.subr.mxu0 0.0
  %826 = vmatpush1.xpose.msra.mxu0 0.0
  %827 = vmatprep.mubr.f32.mxu0 0.0
  %828 = vmatmul.mubr.f32.gmra.mrb[0].mxu0 %v659
  %v829 = vpop.f32.mrb[0].mxu0
  %v830 = vadd.f32 0.0, %v829
  %v831 = vpop.f32.mrb[0].mxu0
  %832 = vmatprep.mubr.f32.mxu0 0.0
  %833 = vmatmul.mubr.f32.gmra.mrb[0].mxu0 %v662
  %v834 = vpop.f32.mrb[0].mxu0
  %v835 = vadd.f32 0.0, %v834
  %v836 = vpop.f32.mrb[0].mxu0
  %837 = vdwg.mxu0
  %v839 = vsel %vm99, %v743, 0
  %v842 = vsel %vm99, %v748, 0
  %844 = vmatprep.subr.mxu0 0.0
  %845 = vmatpush1.msra.mxu0 %v373
  %846 = vmatprep.subr.mxu0 0.0
  %847 = vmatpush1.msra.mxu0 %v378
  %848 = vmatprep.subr.mxu0 0.0
  %849 = vmatpush1.msra.mxu0 %v383
  %850 = vmatprep.subr.mxu0 0.0
  %851 = vmatpush1.msra.mxu0 %v388
  %852 = vmatprep.subr.mxu0 0.0
  %853 = vmatpush1.msra.mxu0 0.0
  %854 = vmatprep.subr.mxu0 0.0
  %855 = vmatpush1.msra.mxu0 0.0
  %856 = vmatprep.subr.mxu0 0.0
  %857 = vmatpush1.msra.mxu0 0.0
  %858 = vmatprep.subr.mxu0 0.0
  %859 = vmatpush1.msra.mxu0 0.0
  %860 = vmatprep.subr.mxu0 0.0
  %861 = vmatpush1.msra.mxu0 0.0
  %862 = vmatprep.subr.mxu0 0.0
  %863 = vmatpush1.msra.mxu0 0.0
  %864 = vmatprep.subr.mxu0 0.0
  %865 = vmatpush1.msra.mxu0 0.0
  %866 = vmatprep.subr.mxu0 0.0
  %867 = vmatpush1.msra.mxu0 0.0
  %868 = vmatprep.subr.mxu0 0.0
  %869 = vmatpush1.msra.mxu0 0.0
  %870 = vmatprep.subr.mxu0 0.0
  %871 = vmatpush1.msra.mxu0 0.0
  %872 = vmatprep.subr.mxu0 0.0
  %873 = vmatpush1.msra.mxu0 0.0
  %874 = vmatprep.subr.mxu0 0.0
  %875 = vmatpush1.msra.mxu0 0.0
  %876 = vmatprep.subr.mxu0 0.0
  %877 = vmatpush1.msra.mxu0 0.0
  %878 = vmatprep.subr.mxu0 0.0
  %879 = vmatpush1.msra.mxu0 0.0
  %880 = vmatprep.subr.mxu0 0.0
  %881 = vmatpush1.msra.mxu0 0.0
  %882 = vmatprep.subr.mxu0 0.0
  %883 = vmatpush1.msra.mxu0 0.0
  %884 = vmatprep.subr.mxu0 0.0
  %885 = vmatpush1.msra.mxu0 0.0
  %886 = vmatprep.subr.mxu0 0.0
  %887 = vmatpush1.msra.mxu0 0.0
  %888 = vmatprep.subr.mxu0 0.0
  %889 = vmatpush1.msra.mxu0 0.0
  %890 = vmatprep.subr.mxu0 0.0
  %891 = vmatpush1.msra.mxu0 0.0
  %892 = vmatprep.subr.mxu0 0.0
  %893 = vmatpush1.msra.mxu0 0.0
  %894 = vmatprep.subr.mxu0 0.0
  %895 = vmatpush1.msra.mxu0 0.0
  %896 = vmatprep.subr.mxu0 0.0
  %897 = vmatpush1.msra.mxu0 0.0
  %898 = vmatprep.subr.mxu0 0.0
  %899 = vmatpush1.msra.mxu0 0.0
  %900 = vmatprep.subr.mxu0 0.0
  %901 = vmatpush1.msra.mxu0 0.0
  %902 = vmatprep.subr.mxu0 0.0
  %903 = vmatpush1.msra.mxu0 0.0
  %904 = vmatprep.subr.mxu0 0.0
  %905 = vmatpush1.msra.mxu0 0.0
  %906 = vmatprep.subr.mxu0 0.0
  %907 = vmatpush1.msra.mxu0 0.0
  %908 = vmatprep.mubr.f32.mxu0 0.0
  %909 = vmatmul.mubr.f32.gmra.mrb[0].mxu0 %v839
  %v910 = vpop.f32.mrb[0].mxu0
  %v911 = vadd.f32 0.0, %v910
  %v912 = vpop.f32.mrb[0].mxu0
  %913 = vmatprep.mubr.f32.mxu0 0.0
  %914 = vmatmul.mubr.f32.gmra.mrb[0].mxu0 %v842
  %v915 = vpop.f32.mrb[0].mxu0
  %v916 = vadd.f32 0.0, %v915
  %v917 = vpop.f32.mrb[0].mxu0
  %918 = vdwg.mxu0
  %919 = vmatprep.subr.mxu0 0.0
  %920 = vmatpush1.msra.mxu0 %v458
  %921 = vmatprep.subr.mxu0 0.0
  %922 = vmatpush1.msra.mxu0 %v463
  %923 = vmatprep.subr.mxu0 0.0
  %924 = vmatpush1.msra.mxu0 %v468
  %925 = vmatprep.subr.mxu0 0.0
  %926 = vmatpush1.msra.mxu0 %v473
  %927 = vmatprep.subr.mxu0 0.0
  %928 = vmatpush1.msra.mxu0 0.0
  %929 = vmatprep.subr.mxu0 0.0
  %930 = vmatpush1.msra.mxu0 0.0
  %931 = vmatprep.subr.mxu0 0.0
  %932 = vmatpush1.msra.mxu0 0.0
  %933 = vmatprep.subr.mxu0 0.0
  %934 = vmatpush1.msra.mxu0 0.0
  %935 = vmatprep.subr.mxu0 0.0
  %936 = vmatpush1.msra.mxu0 0.0
  %937 = vmatprep.subr.mxu0 0.0
  %938 = vmatpush1.msra.mxu0 0.0
  %939 = vmatprep.subr.mxu0 0.0
  %940 = vmatpush1.msra.mxu0 0.0
  %941 = vmatprep.subr.mxu0 0.0
  %942 = vmatpush1.msra.mxu0 0.0
  %943 = vmatprep.subr.mxu0 0.0
  %944 = vmatpush1.msra.mxu0 0.0
  %945 = vmatprep.subr.mxu0 0.0
  %946 = vmatpush1.msra.mxu0 0.0
  %947 = vmatprep.subr.mxu0 0.0
  %948 = vmatpush1.msra.mxu0 0.0
  %949 = vmatprep.subr.mxu0 0.0
  %950 = vmatpush1.msra.mxu0 0.0
  %951 = vmatprep.subr.mxu0 0.0
  %952 = vmatpush1.msra.mxu0 0.0
  %953 = vmatprep.subr.mxu0 0.0
  %954 = vmatpush1.msra.mxu0 0.0
  %955 = vmatprep.subr.mxu0 0.0
  %956 = vmatpush1.msra.mxu0 0.0
  %957 = vmatprep.subr.mxu0 0.0
  %958 = vmatpush1.msra.mxu0 0.0
  %959 = vmatprep.subr.mxu0 0.0
  %960 = vmatpush1.msra.mxu0 0.0
  %961 = vmatprep.subr.mxu0 0.0
  %962 = vmatpush1.msra.mxu0 0.0
  %963 = vmatprep.subr.mxu0 0.0
  %964 = vmatpush1.msra.mxu0 0.0
  %965 = vmatprep.subr.mxu0 0.0
  %966 = vmatpush1.msra.mxu0 0.0
  %967 = vmatprep.subr.mxu0 0.0
  %968 = vmatpush1.msra.mxu0 0.0
  %969 = vmatprep.subr.mxu0 0.0
  %970 = vmatpush1.msra.mxu0 0.0
  %971 = vmatprep.subr.mxu0 0.0
  %972 = vmatpush1.msra.mxu0 0.0
  %973 = vmatprep.subr.mxu0 0.0
  %974 = vmatpush1.msra.mxu0 0.0
  %975 = vmatprep.subr.mxu0 0.0
  %976 = vmatpush1.msra.mxu0 0.0
  %977 = vmatprep.subr.mxu0 0.0
  %978 = vmatpush1.msra.mxu0 0.0
  %979 = vmatprep.subr.mxu0 0.0
  %980 = vmatpush1.msra.mxu0 0.0
  %981 = vmatprep.subr.mxu0 0.0
  %982 = vmatpush1.msra.mxu0 0.0
  %983 = vmatprep.mubr.f32.mxu0 0.0
  %984 = vmatmul.mubr.f32.gmra.mrb[0].mxu0 %v839
  %v985 = vpop.f32.mrb[0].mxu0
  %v986 = vadd.f32 0.0, %v985
  %v987 = vpop.f32.mrb[0].mxu0
  %988 = vmatprep.mubr.f32.mxu0 0.0
  %989 = vmatmul.mubr.f32.gmra.mrb[0].mxu0 %v842
  %v990 = vpop.f32.mrb[0].mxu0
  %v991 = vadd.f32 0.0, %v990
  %v992 = vpop.f32.mrb[0].mxu0
  %993 = vdwg.mxu0
  %v995 = vsel %vm99, %v830, 0
  %v998 = vsel %vm99, %v835, 0
  %1000 = vmatprep.subr.mxu0 0.0
  %1001 = vmatpush1.msra.mxu0 %v543
  %1002 = vmatprep.subr.mxu0 0.0
  %1003 = vmatpush1.msra.mxu0 %v548
  %1004 = vmatprep.subr.mxu0 0.0
  %1005 = vmatpush1.msra.mxu0 %v553
  %1006 = vmatprep.subr.mxu0 0.0
  %1007 = vmatpush1.msra.mxu0 %v558
  %1008 = vmatprep.subr.mxu0 0.0
  %1009 = vmatpush1.msra.mxu0 0.0
  %1010 = vmatprep.subr.mxu0 0.0
  %1011 = vmatpush1.msra.mxu0 0.0
  %1012 = vmatprep.subr.mxu0 0.0
  %1013 = vmatpush1.msra.mxu0 0.0
  %1014 = vmatprep.subr.mxu0 0.0
  %1015 = vmatpush1.msra.mxu0 0.0
  %1016 = vmatprep.subr.mxu0 0.0
  %1017 = vmatpush1.msra.mxu0 0.0
  %1018 = vmatprep.subr.mxu0 0.0
  %1019 = vmatpush1.msra.mxu0 0.0
  %1020 = vmatprep.subr.mxu0 0.0
  %1021 = vmatpush1.msra.mxu0 0.0
  %1022 = vmatprep.subr.mxu0 0.0
  %1023 = vmatpush1.msra.mxu0 0.0
  %1024 = vmatprep.subr.mxu0 0.0
  %1025 = vmatpush1.msra.mxu0 0.0
  %1026 = vmatprep.subr.mxu0 0.0
  %1027 = vmatpush1.msra.mxu0 0.0
  %1028 = vmatprep.subr.mxu0 0.0
  %1029 = vmatpush1.msra.mxu0 0.0
  %1030 = vmatprep.subr.mxu0 0.0
  %1031 = vmatpush1.msra.mxu0 0.0
  %1032 = vmatprep.subr.mxu0 0.0
  %1033 = vmatpush1.msra.mxu0 0.0
  %1034 = vmatprep.subr.mxu0 0.0
  %1035 = vmatpush1.msra.mxu0 0.0
  %1036 = vmatprep.subr.mxu0 0.0
  %1037 = vmatpush1.msra.mxu0 0.0
  %1038 = vmatprep.subr.mxu0 0.0
  %1039 = vmatpush1.msra.mxu0 0.0
  %1040 = vmatprep.subr.mxu0 0.0
  %1041 = vmatpush1.msra.mxu0 0.0
  %1042 = vmatprep.subr.mxu0 0.0
  %1043 = vmatpush1.msra.mxu0 0.0
  %1044 = vmatprep.subr.mxu0 0.0
  %1045 = vmatpush1.msra.mxu0 0.0
  %1046 = vmatprep.subr.mxu0 0.0
  %1047 = vmatpush1.msra.mxu0 0.0
  %1048 = vmatprep.subr.mxu0 0.0
  %1049 = vmatpush1.msra.mxu0 0.0
  %1050 = vmatprep.subr.mxu0 0.0
  %1051 = vmatpush1.msra.mxu0 0.0
  %1052 = vmatprep.subr.mxu0 0.0
  %1053 = vmatpush1.msra.mxu0 0.0
  %1054 = vmatprep.subr.mxu0 0.0
  %1055 = vmatpush1.msra.mxu0 0.0
  %1056 = vmatprep.subr.mxu0 0.0
  %1057 = vmatpush1.msra.mxu0 0.0
  %1058 = vmatprep.subr.mxu0 0.0
  %1059 = vmatpush1.msra.mxu0 0.0
  %1060 = vmatprep.subr.mxu0 0.0
  %1061 = vmatpush1.msra.mxu0 0.0
  %1062 = vmatprep.subr.mxu0 0.0
  %1063 = vmatpush1.msra.mxu0 0.0
  %1064 = vmatprep.mubr.f32.mxu0 0.0
  %1065 = vmatmul.mubr.f32.gmra.mrb[0].mxu0 %v995
  %v1066 = vpop.f32.mrb[0].mxu0
  %v1067 = vadd.f32 0.0, %v1066
  %v1068 = vpop.f32.mrb[0].mxu0
  %1069 = vmatprep.mubr.f32.mxu0 0.0
  %1070 = vmatmul.mubr.f32.gmra.mrb[0].mxu0 %v998
  %v1071 = vpop.f32.mrb[0].mxu0
  %v1072 = vadd.f32 0.0, %v1071
  %v1073 = vpop.f32.mrb[0].mxu0
  %1074 = vdwg.mxu0
  %1075 = vmatprep.subr.mxu0 0.0
  %1076 = vmatpush1.msra.mxu0 %v628
  %1077 = vmatprep.subr.mxu0 0.0
  %1078 = vmatpush1.msra.mxu0 %v633
  %1079 = vmatprep.subr.mxu0 0.0
  %1080 = vmatpush1.msra.mxu0 %v638
  %1081 = vmatprep.subr.mxu0 0.0
  %1082 = vmatpush1.msra.mxu0 %v643
  %1083 = vmatprep.subr.mxu0 0.0
  %1084 = vmatpush1.msra.mxu0 0.0
  %1085 = vmatprep.subr.mxu0 0.0
  %1086 = vmatpush1.msra.mxu0 0.0
  %1087 = vmatprep.subr.mxu0 0.0
  %1088 = vmatpush1.msra.mxu0 0.0
  %1089 = vmatprep.subr.mxu0 0.0
  %1090 = vmatpush1.msra.mxu0 0.0
  %1091 = vmatprep.subr.mxu0 0.0
  %1092 = vmatpush1.msra.mxu0 0.0
  %1093 = vmatprep.subr.mxu0 0.0
  %1094 = vmatpush1.msra.mxu0 0.0
  %1095 = vmatprep.subr.mxu0 0.0
  %1096 = vmatpush1.msra.mxu0 0.0
  %1097 = vmatprep.subr.mxu0 0.0
  %1098 = vmatpush1.msra.mxu0 0.0
  %1099 = vmatprep.subr.mxu0 0.0
  %1100 = vmatpush1.msra.mxu0 0.0
  %1101 = vmatprep.subr.mxu0 0.0
  %1102 = vmatpush1.msra.mxu0 0.0
  %1103 = vmatprep.subr.mxu0 0.0
  %1104 = vmatpush1.msra.mxu0 0.0
  %1105 = vmatprep.subr.mxu0 0.0
  %1106 = vmatpush1.msra.mxu0 0.0
  %1107 = vmatprep.subr.mxu0 0.0
  %1108 = vmatpush1.msra.mxu0 0.0
  %1109 = vmatprep.subr.mxu0 0.0
  %1110 = vmatpush1.msra.mxu0 0.0
  %1111 = vmatprep.subr.mxu0 0.0
  %1112 = vmatpush1.msra.mxu0 0.0
  %1113 = vmatprep.subr.mxu0 0.0
  %1114 = vmatpush1.msra.mxu0 0.0
  %1115 = vmatprep.subr.mxu0 0.0
  %1116 = vmatpush1.msra.mxu0 0.0
  %1117 = vmatprep.subr.mxu0 0.0
  %1118 = vmatpush1.msra.mxu0 0.0
  %1119 = vmatprep.subr.mxu0 0.0
  %1120 = vmatpush1.msra.mxu0 0.0
  %1121 = vmatprep.subr.mxu0 0.0
  %1122 = vmatpush1.msra.mxu0 0.0
  %1123 = vmatprep.subr.mxu0 0.0
  %1124 = vmatpush1.msra.mxu0 0.0
  %1125 = vmatprep.subr.mxu0 0.0
  %1126 = vmatpush1.msra.mxu0 0.0
  %1127 = vmatprep.subr.mxu0 0.0
  %1128 = vmatpush1.msra.mxu0 0.0
  %1129 = vmatprep.subr.mxu0 0.0
  %1130 = vmatpush1.msra.mxu0 0.0
  %1131 = vmatprep.subr.mxu0 0.0
  %1132 = vmatpush1.msra.mxu0 0.0
  %1133 = vmatprep.subr.mxu0 0.0
  %1134 = vmatpush1.msra.mxu0 0.0
  %1135 = vmatprep.subr.mxu0 0.0
  %1136 = vmatpush1.msra.mxu0 0.0
  %1137 = vmatprep.subr.mxu0 0.0
  %1138 = vmatpush1.msra.mxu0 0.0
  %1139 = vmatprep.mubr.f32.mxu0 0.0
  %1140 = vmatmul.mubr.f32.gmra.mrb[0].mxu0 %v995
  %v1141 = vpop.f32.mrb[0].mxu0
  %v1142 = vadd.f32 0.0, %v1141
  %v1143 = vpop.f32.mrb[0].mxu0
  %1144 = vmatprep.mubr.f32.mxu0 0.0
  %1145 = vmatmul.mubr.f32.gmra.mrb[0].mxu0 %v998
  %v1146 = vpop.f32.mrb[0].mxu0
  %v1147 = vadd.f32 0.0, %v1146
  %v1148 = vpop.f32.mrb[0].mxu0
  %1149 = vdwg.mxu0
  %v1150 = vsel %vm657, %v911, -inf
  %1151 = vmax.xlane.f32.xlu0 %v1150
  %v1152 = vpop.xlane.xlu0 %1151
  %v1153 = vsel %vm657, %v916, -inf
  %1154 = vmax.xlane.f32.xlu0 %v1153
  %v1155 = vpop.xlane.xlu0 %1154
  %v1156 = vsel %vm657, %v986, -inf
  %1157 = vmax.xlane.f32.xlu0 %v1156
  %v1158 = vpop.xlane.xlu0 %1157
  %v1159 = vsel %vm657, %v991, -inf
  %1160 = vmax.xlane.f32.xlu0 %v1159
  %v1161 = vpop.xlane.xlu0 %1160
  %v1162 = vsel %vm657, %v1067, -inf
  %1163 = vmax.xlane.f32.xlu0 %v1162
  %v1164 = vpop.xlane.xlu0 %1163
  %v1165 = vsel %vm657, %v1072, -inf
  %1166 = vmax.xlane.f32.xlu0 %v1165
  %v1167 = vpop.xlane.xlu0 %1166
  %v1168 = vsel %vm657, %v1142, -inf
  %1169 = vmax.xlane.f32.xlu0 %v1168
  %v1170 = vpop.xlane.xlu0 %1169
  %v1171 = vsel %vm657, %v1147, -inf
  %1172 = vmax.xlane.f32.xlu0 %v1171
  %v1173 = vpop.xlane.xlu0 %1172
  %v1174 = vmax.f32 %v1152, %v1158
  %v1175 = vmax.f32 %v1155, %v1161
  %v1176 = vmax.f32 %v1164, %v1170
  %v1177 = vmax.f32 %v1167, %v1173
  %v1178 = vsub.f32 %v911, %v1174
  %v1179 = vsub.f32 %v916, %v1175
  %v1180 = vsub.f32 %v986, %v1174
  %v1181 = vsub.f32 %v991, %v1175
  %v1182 = vsub.f32 %v1067, %v1176
  %v1183 = vsub.f32 %v1072, %v1177
  %v1184 = vsub.f32 %v1142, %v1176
  %v1185 = vsub.f32 %v1147, %v1177
  %v1186 = vmul.f32 %v1178, 1.442695
  %v1187 = vpow.pop %v1186
  %v1188 = vmul.f32 %v1179, 1.442695
  %v1189 = vpow.pop %v1188
  %v1190 = vmul.f32 %v1180, 1.442695
  %v1191 = vpow.pop %v1190
  %v1192 = vmul.f32 %v1181, 1.442695
  %v1193 = vpow.pop %v1192
  %v1194 = vmul.f32 %v1182, 1.442695
  %v1195 = vpow.pop %v1194
  %v1196 = vmul.f32 %v1183, 1.442695
  %v1197 = vpow.pop %v1196
  %v1198 = vmul.f32 %v1184, 1.442695
  %v1199 = vpow.pop %v1198
  %v1200 = vmul.f32 %v1185, 1.442695
  %v1201 = vpow.pop %v1200
  %v1202 = vsel %vm657, %v1187, 0.0
  %1203 = vadd.xlane.f32.xlu0 %v1202
  %v1204 = vpop.xlane.xlu0 %1203
  %v1205 = vsel %vm657, %v1189, 0.0
  %1206 = vadd.xlane.f32.xlu0 %v1205
  %v1207 = vpop.xlane.xlu0 %1206
  %v1208 = vsel %vm657, %v1191, 0.0
  %1209 = vadd.xlane.f32.xlu0 %v1208
  %v1210 = vpop.xlane.xlu0 %1209
  %v1211 = vsel %vm657, %v1193, 0.0
  %1212 = vadd.xlane.f32.xlu0 %v1211
  %v1213 = vpop.xlane.xlu0 %1212
  %v1214 = vsel %vm657, %v1195, 0.0
  %1215 = vadd.xlane.f32.xlu0 %v1214
  %v1216 = vpop.xlane.xlu0 %1215
  %v1217 = vsel %vm657, %v1197, 0.0
  %1218 = vadd.xlane.f32.xlu0 %v1217
  %v1219 = vpop.xlane.xlu0 %1218
  %v1220 = vsel %vm657, %v1199, 0.0
  %1221 = vadd.xlane.f32.xlu0 %v1220
  %v1222 = vpop.xlane.xlu0 %1221
  %v1223 = vsel %vm657, %v1201, 0.0
  %1224 = vadd.xlane.f32.xlu0 %v1223
  %v1225 = vpop.xlane.xlu0 %1224
  %v1226 = vadd.f32 %v1204, %v1210
  %v1227 = vadd.f32 %v1207, %v1213
  %v1228 = vadd.f32 %v1216, %v1222
  %v1229 = vadd.f32 %v1219, %v1225
  %v1230 = vrcp.pop %v1226
  %v1231 = vrcp.pop %v1227
  %v1232 = vrcp.pop %v1228
  %v1233 = vrcp.pop %v1229
  %v1234 = vmul.f32 %v1187, %v1230
  %v1235 = vmul.f32 %v1189, %v1231
  %v1236 = vmul.f32 %v1191, %v1230
  %v1237 = vmul.f32 %v1193, %v1231
  %v1238 = vmul.f32 %v1195, %v1232
  %v1239 = vmul.f32 %v1197, %v1233
  %v1240 = vmul.f32 %v1199, %v1232
  %v1241 = vmul.f32 %v1201, %v1233
  %v1243 = vsel %vm657, %v1234, 0
  %v1246 = vsel %vm657, %v1235, 0
  %v1249 = vsel %vm657, %v63, 0
  %v1252 = vsel %vm657, %v64, 0
  %v1255 = vsel %vm657, %v65, 0
  %v1258 = vsel %vm657, %v66, 0
  %1260 = vmatprep.subr.mxu0 0.0
  %1261 = vmatpush1.xpose.msra.mxu0 %v1249
  %1262 = vmatprep.subr.mxu0 0.0
  %1263 = vmatpush1.xpose.msra.mxu0 %v1252
  %1264 = vmatprep.subr.mxu0 0.0
  %1265 = vmatpush1.xpose.msra.mxu0 %v1255
  %1266 = vmatprep.subr.mxu0 0.0
  %1267 = vmatpush1.xpose.msra.mxu0 %v1258
  %1268 = vmatprep.subr.mxu0 0.0
  %1269 = vmatpush1.xpose.msra.mxu0 0.0
  %1270 = vmatprep.subr.mxu0 0.0
  %1271 = vmatpush1.xpose.msra.mxu0 0.0
  %1272 = vmatprep.subr.mxu0 0.0
  %1273 = vmatpush1.xpose.msra.mxu0 0.0
  %1274 = vmatprep.subr.mxu0 0.0
  %1275 = vmatpush1.xpose.msra.mxu0 0.0
  %1276 = vmatprep.subr.mxu0 0.0
  %1277 = vmatpush1.xpose.msra.mxu0 0.0
  %1278 = vmatprep.subr.mxu0 0.0
  %1279 = vmatpush1.xpose.msra.mxu0 0.0
  %1280 = vmatprep.subr.mxu0 0.0
  %1281 = vmatpush1.xpose.msra.mxu0 0.0
  %1282 = vmatprep.subr.mxu0 0.0
  %1283 = vmatpush1.xpose.msra.mxu0 0.0
  %1284 = vmatprep.subr.mxu0 0.0
  %1285 = vmatpush1.xpose.msra.mxu0 0.0
  %1286 = vmatprep.subr.mxu0 0.0
  %1287 = vmatpush1.xpose.msra.mxu0 0.0
  %1288 = vmatprep.subr.mxu0 0.0
  %1289 = vmatpush1.xpose.msra.mxu0 0.0
  %1290 = vmatprep.subr.mxu0 0.0
  %1291 = vmatpush1.xpose.msra.mxu0 0.0
  %1292 = vmatprep.subr.mxu0 0.0
  %1293 = vmatpush1.xpose.msra.mxu0 0.0
  %1294 = vmatprep.subr.mxu0 0.0
  %1295 = vmatpush1.xpose.msra.mxu0 0.0
  %1296 = vmatprep.subr.mxu0 0.0
  %1297 = vmatpush1.xpose.msra.mxu0 0.0
  %1298 = vmatprep.subr.mxu0 0.0
  %1299 = vmatpush1.xpose.msra.mxu0 0.0
  %1300 = vmatprep.subr.mxu0 0.0
  %1301 = vmatpush1.xpose.msra.mxu0 0.0
  %1302 = vmatprep.subr.mxu0 0.0
  %1303 = vmatpush1.xpose.msra.mxu0 0.0
  %1304 = vmatprep.subr.mxu0 0.0
  %1305 = vmatpush1.xpose.msra.mxu0 0.0
  %1306 = vmatprep.subr.mxu0 0.0
  %1307 = vmatpush1.xpose.msra.mxu0 0.0
  %1308 = vmatprep.subr.mxu0 0.0
  %1309 = vmatpush1.xpose.msra.mxu0 0.0
  %1310 = vmatprep.subr.mxu0 0.0
  %1311 = vmatpush1.xpose.msra.mxu0 0.0
  %1312 = vmatprep.subr.mxu0 0.0
  %1313 = vmatpush1.xpose.msra.mxu0 0.0
  %1314 = vmatprep.subr.mxu0 0.0
  %1315 = vmatpush1.xpose.msra.mxu0 0.0
  %1316 = vmatprep.subr.mxu0 0.0
  %1317 = vmatpush1.xpose.msra.mxu0 0.0
  %1318 = vmatprep.subr.mxu0 0.0
  %1319 = vmatpush1.xpose.msra.mxu0 0.0
  %1320 = vmatprep.subr.mxu0 0.0
  %1321 = vmatpush1.xpose.msra.mxu0 0.0
  %1322 = vmatprep.subr.mxu0 0.0
  %1323 = vmatpush1.xpose.msra.mxu0 0.0
  %1324 = vmatprep.mubr.f32.mxu0 0.0
  %1325 = vmatmul.mubr.f32.gmra.mrb[0].mxu0 %v1243
  %v1326 = vpop.f32.mrb[0].mxu0
  %v1327 = vadd.f32 0.0, %v1326
  %v1328 = vpop.f32.mrb[0].mxu0
  %1329 = vmatprep.mubr.f32.mxu0 0.0
  %1330 = vmatmul.mubr.f32.gmra.mrb[0].mxu0 %v1246
  %v1331 = vpop.f32.mrb[0].mxu0
  %v1332 = vadd.f32 0.0, %v1331
  %v1333 = vpop.f32.mrb[0].mxu0
  %1334 = vdwg.mxu0
  %v1336 = vsel %vm657, %v1236, 0
  %v1339 = vsel %vm657, %v1237, 0
  %v1342 = vsel %vm657, %v67, 0
  %v1345 = vsel %vm657, %v68, 0
  %v1348 = vsel %vm657, %v69, 0
  %v1351 = vsel %vm657, %v70, 0
  %1353 = vmatprep.subr.mxu0 0.0
  %1354 = vmatpush1.xpose.msra.mxu0 %v1342
  %1355 = vmatprep.subr.mxu0 0.0
  %1356 = vmatpush1.xpose.msra.mxu0 %v1345
  %1357 = vmatprep.subr.mxu0 0.0
  %1358 = vmatpush1.xpose.msra.mxu0 %v1348
  %1359 = vmatprep.subr.mxu0 0.0
  %1360 = vmatpush1.xpose.msra.mxu0 %v1351
  %1361 = vmatprep.subr.mxu0 0.0
  %1362 = vmatpush1.xpose.msra.mxu0 0.0
  %1363 = vmatprep.subr.mxu0 0.0
  %1364 = vmatpush1.xpose.msra.mxu0 0.0
  %1365 = vmatprep.subr.mxu0 0.0
  %1366 = vmatpush1.xpose.msra.mxu0 0.0
  %1367 = vmatprep.subr.mxu0 0.0
  %1368 = vmatpush1.xpose.msra.mxu0 0.0
  %1369 = vmatprep.subr.mxu0 0.0
  %1370 = vmatpush1.xpose.msra.mxu0 0.0
  %1371 = vmatprep.subr.mxu0 0.0
  %1372 = vmatpush1.xpose.msra.mxu0 0.0
  %1373 = vmatprep.subr.mxu0 0.0
  %1374 = vmatpush1.xpose.msra.mxu0 0.0
  %1375 = vmatprep.subr.mxu0 0.0
  %1376 = vmatpush1.xpose.msra.mxu0 0.0
  %1377 = vmatprep.subr.mxu0 0.0
  %1378 = vmatpush1.xpose.msra.mxu0 0.0
  %1379 = vmatprep.subr.mxu0 0.0
  %1380 = vmatpush1.xpose.msra.mxu0 0.0
  %1381 = vmatprep.subr.mxu0 0.0
  %1382 = vmatpush1.xpose.msra.mxu0 0.0
  %1383 = vmatprep.subr.mxu0 0.0
  %1384 = vmatpush1.xpose.msra.mxu0 0.0
  %1385 = vmatprep.subr.mxu0 0.0
  %1386 = vmatpush1.xpose.msra.mxu0 0.0
  %1387 = vmatprep.subr.mxu0 0.0
  %1388 = vmatpush1.xpose.msra.mxu0 0.0
  %1389 = vmatprep.subr.mxu0 0.0
  %1390 = vmatpush1.xpose.msra.mxu0 0.0
  %1391 = vmatprep.subr.mxu0 0.0
  %1392 = vmatpush1.xpose.msra.mxu0 0.0
  %1393 = vmatprep.subr.mxu0 0.0
  %1394 = vmatpush1.xpose.msra.mxu0 0.0
  %1395 = vmatprep.subr.mxu0 0.0
  %1396 = vmatpush1.xpose.msra.mxu0 0.0
  %1397 = vmatprep.subr.mxu0 0.0
  %1398 = vmatpush1.xpose.msra.mxu0 0.0
  %1399 = vmatprep.subr.mxu0 0.0
  %1400 = vmatpush1.xpose.msra.mxu0 0.0
  %1401 = vmatprep.subr.mxu0 0.0
  %1402 = vmatpush1.xpose.msra.mxu0 0.0
  %1403 = vmatprep.subr.mxu0 0.0
  %1404 = vmatpush1.xpose.msra.mxu0 0.0
  %1405 = vmatprep.subr.mxu0 0.0
  %1406 = vmatpush1.xpose.msra.mxu0 0.0
  %1407 = vmatprep.subr.mxu0 0.0
  %1408 = vmatpush1.xpose.msra.mxu0 0.0
  %1409 = vmatprep.subr.mxu0 0.0
  %1410 = vmatpush1.xpose.msra.mxu0 0.0
  %1411 = vmatprep.subr.mxu0 0.0
  %1412 = vmatpush1.xpose.msra.mxu0 0.0
  %1413 = vmatprep.subr.mxu0 0.0
  %1414 = vmatpush1.xpose.msra.mxu0 0.0
  %1415 = vmatprep.subr.mxu0 0.0
  %1416 = vmatpush1.xpose.msra.mxu0 0.0
  %1417 = vmatprep.mubr.f32.mxu0 0.0
  %1418 = vmatmul.mubr.f32.gmra.mrb[0].mxu0 %v1336
  %v1419 = vpop.f32.mrb[0].mxu0
  %v1420 = vadd.f32 0.0, %v1419
  %v1421 = vpop.f32.mrb[0].mxu0
  %1422 = vmatprep.mubr.f32.mxu0 0.0
  %1423 = vmatmul.mubr.f32.gmra.mrb[0].mxu0 %v1339
  %v1424 = vpop.f32.mrb[0].mxu0
  %v1425 = vadd.f32 0.0, %v1424
  %v1426 = vpop.f32.mrb[0].mxu0
  %1427 = vdwg.mxu0
  %v1429 = vsel %vm657, %v1238, 0
  %v1432 = vsel %vm657, %v1239, 0
  %v1435 = vsel %vm657, %v71, 0
  %v1438 = vsel %vm657, %v72, 0
  %v1441 = vsel %vm657, %v73, 0
  %v1444 = vsel %vm657, %v74, 0
  %1446 = vmatprep.subr.mxu0 0.0
  %1447 = vmatpush1.xpose.msra.mxu0 %v1435
  %1448 = vmatprep.subr.mxu0 0.0
  %1449 = vmatpush1.xpose.msra.mxu0 %v1438
  %1450 = vmatprep.subr.mxu0 0.0
  %1451 = vmatpush1.xpose.msra.mxu0 %v1441
  %1452 = vmatprep.subr.mxu0 0.0
  %1453 = vmatpush1.xpose.msra.mxu0 %v1444
  %1454 = vmatprep.subr.mxu0 0.0
  %1455 = vmatpush1.xpose.msra.mxu0 0.0
  %1456 = vmatprep.subr.mxu0 0.0
  %1457 = vmatpush1.xpose.msra.mxu0 0.0
  %1458 = vmatprep.subr.mxu0 0.0
  %1459 = vmatpush1.xpose.msra.mxu0 0.0
  %1460 = vmatprep.subr.mxu0 0.0
  %1461 = vmatpush1.xpose.msra.mxu0 0.0
  %1462 = vmatprep.subr.mxu0 0.0
  %1463 = vmatpush1.xpose.msra.mxu0 0.0
  %1464 = vmatprep.subr.mxu0 0.0
  %1465 = vmatpush1.xpose.msra.mxu0 0.0
  %1466 = vmatprep.subr.mxu0 0.0
  %1467 = vmatpush1.xpose.msra.mxu0 0.0
  %1468 = vmatprep.subr.mxu0 0.0
  %1469 = vmatpush1.xpose.msra.mxu0 0.0
  %1470 = vmatprep.subr.mxu0 0.0
  %1471 = vmatpush1.xpose.msra.mxu0 0.0
  %1472 = vmatprep.subr.mxu0 0.0
  %1473 = vmatpush1.xpose.msra.mxu0 0.0
  %1474 = vmatprep.subr.mxu0 0.0
  %1475 = vmatpush1.xpose.msra.mxu0 0.0
  %1476 = vmatprep.subr.mxu0 0.0
  %1477 = vmatpush1.xpose.msra.mxu0 0.0
  %1478 = vmatprep.subr.mxu0 0.0
  %1479 = vmatpush1.xpose.msra.mxu0 0.0
  %1480 = vmatprep.subr.mxu0 0.0
  %1481 = vmatpush1.xpose.msra.mxu0 0.0
  %1482 = vmatprep.subr.mxu0 0.0
  %1483 = vmatpush1.xpose.msra.mxu0 0.0
  %1484 = vmatprep.subr.mxu0 0.0
  %1485 = vmatpush1.xpose.msra.mxu0 0.0
  %1486 = vmatprep.subr.mxu0 0.0
  %1487 = vmatpush1.xpose.msra.mxu0 0.0
  %1488 = vmatprep.subr.mxu0 0.0
  %1489 = vmatpush1.xpose.msra.mxu0 0.0
  %1490 = vmatprep.subr.mxu0 0.0
  %1491 = vmatpush1.xpose.msra.mxu0 0.0
  %1492 = vmatprep.subr.mxu0 0.0
  %1493 = vmatpush1.xpose.msra.mxu0 0.0
  %1494 = vmatprep.subr.mxu0 0.0
  %1495 = vmatpush1.xpose.msra.mxu0 0.0
  %1496 = vmatprep.subr.mxu0 0.0
  %1497 = vmatpush1.xpose.msra.mxu0 0.0
  %1498 = vmatprep.subr.mxu0 0.0
  %1499 = vmatpush1.xpose.msra.mxu0 0.0
  %1500 = vmatprep.subr.mxu0 0.0
  %1501 = vmatpush1.xpose.msra.mxu0 0.0
  %1502 = vmatprep.subr.mxu0 0.0
  %1503 = vmatpush1.xpose.msra.mxu0 0.0
  %1504 = vmatprep.subr.mxu0 0.0
  %1505 = vmatpush1.xpose.msra.mxu0 0.0
  %1506 = vmatprep.subr.mxu0 0.0
  %1507 = vmatpush1.xpose.msra.mxu0 0.0
  %1508 = vmatprep.subr.mxu0 0.0
  %1509 = vmatpush1.xpose.msra.mxu0 0.0
  %1510 = vmatprep.mubr.f32.mxu0 0.0
  %1511 = vmatmul.mubr.f32.gmra.mrb[0].mxu0 %v1429
  %v1512 = vpop.f32.mrb[0].mxu0
  %v1513 = vadd.f32 0.0, %v1512
  %v1514 = vpop.f32.mrb[0].mxu0
  %1515 = vmatprep.mubr.f32.mxu0 0.0
  %1516 = vmatmul.mubr.f32.gmra.mrb[0].mxu0 %v1432
  %v1517 = vpop.f32.mrb[0].mxu0
  %v1518 = vadd.f32 0.0, %v1517
  %v1519 = vpop.f32.mrb[0].mxu0
  %1520 = vdwg.mxu0
  %v1522 = vsel %vm657, %v1240, 0
  %v1525 = vsel %vm657, %v1241, 0
  %v1528 = vsel %vm657, %v75, 0
  %v1531 = vsel %vm657, %v76, 0
  %v1534 = vsel %vm657, %v77, 0
  %v1537 = vsel %vm657, %v78, 0
  %1539 = vmatprep.subr.mxu0 0.0
  %1540 = vmatpush1.xpose.msra.mxu0 %v1528
  %1541 = vmatprep.subr.mxu0 0.0
  %1542 = vmatpush1.xpose.msra.mxu0 %v1531
  %1543 = vmatprep.subr.mxu0 0.0
  %1544 = vmatpush1.xpose.msra.mxu0 %v1534
  %1545 = vmatprep.subr.mxu0 0.0
  %1546 = vmatpush1.xpose.msra.mxu0 %v1537
  %1547 = vmatprep.subr.mxu0 0.0
  %1548 = vmatpush1.xpose.msra.mxu0 0.0
  %1549 = vmatprep.subr.mxu0 0.0
  %1550 = vmatpush1.xpose.msra.mxu0 0.0
  %1551 = vmatprep.subr.mxu0 0.0
  %1552 = vmatpush1.xpose.msra.mxu0 0.0
  %1553 = vmatprep.subr.mxu0 0.0
  %1554 = vmatpush1.xpose.msra.mxu0 0.0
  %1555 = vmatprep.subr.mxu0 0.0
  %1556 = vmatpush1.xpose.msra.mxu0 0.0
  %1557 = vmatprep.subr.mxu0 0.0
  %1558 = vmatpush1.xpose.msra.mxu0 0.0
  %1559 = vmatprep.subr.mxu0 0.0
  %1560 = vmatpush1.xpose.msra.mxu0 0.0
  %1561 = vmatprep.subr.mxu0 0.0
  %1562 = vmatpush1.xpose.msra.mxu0 0.0
  %1563 = vmatprep.subr.mxu0 0.0
  %1564 = vmatpush1.xpose.msra.mxu0 0.0
  %1565 = vmatprep.subr.mxu0 0.0
  %1566 = vmatpush1.xpose.msra.mxu0 0.0
  %1567 = vmatprep.subr.mxu0 0.0
  %1568 = vmatpush1.xpose.msra.mxu0 0.0
  %1569 = vmatprep.subr.mxu0 0.0
  %1570 = vmatpush1.xpose.msra.mxu0 0.0
  %1571 = vmatprep.subr.mxu0 0.0
  %1572 = vmatpush1.xpose.msra.mxu0 0.0
  %1573 = vmatprep.subr.mxu0 0.0
  %1574 = vmatpush1.xpose.msra.mxu0 0.0
  %1575 = vmatprep.subr.mxu0 0.0
  %1576 = vmatpush1.xpose.msra.mxu0 0.0
  %1577 = vmatprep.subr.mxu0 0.0
  %1578 = vmatpush1.xpose.msra.mxu0 0.0
  %1579 = vmatprep.subr.mxu0 0.0
  %1580 = vmatpush1.xpose.msra.mxu0 0.0
  %1581 = vmatprep.subr.mxu0 0.0
  %1582 = vmatpush1.xpose.msra.mxu0 0.0
  %1583 = vmatprep.subr.mxu0 0.0
  %1584 = vmatpush1.xpose.msra.mxu0 0.0
  %1585 = vmatprep.subr.mxu0 0.0
  %1586 = vmatpush1.xpose.msra.mxu0 0.0
  %1587 = vmatprep.subr.mxu0 0.0
  %1588 = vmatpush1.xpose.msra.mxu0 0.0
  %1589 = vmatprep.subr.mxu0 0.0
  %1590 = vmatpush1.xpose.msra.mxu0 0.0
  %1591 = vmatprep.subr.mxu0 0.0
  %1592 = vmatpush1.xpose.msra.mxu0 0.0
  %1593 = vmatprep.subr.mxu0 0.0
  %1594 = vmatpush1.xpose.msra.mxu0 0.0
  %1595 = vmatprep.subr.mxu0 0.0
  %1596 = vmatpush1.xpose.msra.mxu0 0.0
  %1597 = vmatprep.subr.mxu0 0.0
  %1598 = vmatpush1.xpose.msra.mxu0 0.0
  %1599 = vmatprep.subr.mxu0 0.0
  %1600 = vmatpush1.xpose.msra.mxu0 0.0
  %1601 = vmatprep.subr.mxu0 0.0
  %1602 = vmatpush1.xpose.msra.mxu0 0.0
  %1603 = vmatprep.mubr.f32.mxu0 0.0
  %1604 = vmatmul.mubr.f32.gmra.mrb[0].mxu0 %v1522
  %v1605 = vpop.f32.mrb[0].mxu0
  %v1606 = vadd.f32 0.0, %v1605
  %v1607 = vpop.f32.mrb[0].mxu0
  %1608 = vmatprep.mubr.f32.mxu0 0.0
  %1609 = vmatmul.mubr.f32.gmra.mrb[0].mxu0 %v1525
  %v1610 = vpop.f32.mrb[0].mxu0
  %v1611 = vadd.f32 0.0, %v1610
  %v1612 = vpop.f32.mrb[0].mxu0
  %1613 = vdwg.mxu0
  %v1614 = vsel %vm99, %v1327, 0.0
  %v1615 = vsel %vm99, %v1420, 0.0
  %v1616 = vadd.f32 %v1614, %v1615
  %v1617 = vsel %vm99, %v1332, 0.0
  %v1618 = vsel %vm99, %v1425, 0.0
  %v1619 = vadd.f32 %v1617, %v1618
  %v1620 = vsel %vm99, %v1513, 0.0
  %v1621 = vsel %vm99, %v1606, 0.0
  %v1622 = vadd.f32 %v1620, %v1621
  %v1623 = vsel %vm99, %v1518, 0.0
  %v1624 = vsel %vm99, %v1611, 0.0
  %v1625 = vadd.f32 %v1623, %v1624
  %vm1626 = vcmask 122880
  %1627 = vst.msk [vmem:[#allocation2] sm:$0x1] %vm1626, %v1616
  %1628 = vst.msk [vmem:[#allocation2 + $0x20] sm:$0x1] %vm1626, %v1622
  %1631 = vrot.lane.b32.xlu0 %v1616, 112
  %v1632 = vpop.permute.xlu0 %1631
  %1633 = vrot.lane.b32.xlu0 %v1622, 112
  %v1634 = vpop.permute.xlu0 %1633
  %1637 = vst.msk [vmem:[#allocation2 + $0x1] sm:$0x1] %vm1626, %v1632
  %1638 = vst.msk [vmem:[#allocation2 + $0x21] sm:$0x1] %vm1626, %v1634
  %vm1639 = vcmask 123905
  %1640 = vst.msk [vmem:[#allocation2 + $0x1] sm:$0x2] %vm1639, %v1616
  %1641 = vst.msk [vmem:[#allocation2 + $0x21] sm:$0x2] %vm1639, %v1622
  %1642 = vst.msk [vmem:[#allocation2 + $0x2] sm:$0x2] %vm1639, %v1632
  %1643 = vst.msk [vmem:[#allocation2 + $0x22] sm:$0x2] %vm1639, %v1634
  %vm1644 = vcmask 124930
  %1645 = vst.msk [vmem:[#allocation2 + $0x2] sm:$0x4] %vm1644, %v1616
  %1646 = vst.msk [vmem:[#allocation2 + $0x22] sm:$0x4] %vm1644, %v1622
  %1647 = vst.msk [vmem:[#allocation2 + $0x3] sm:$0x4] %vm1644, %v1632
  %1648 = vst.msk [vmem:[#allocation2 + $0x23] sm:$0x4] %vm1644, %v1634
  %vm1649 = vcmask 125955
  %1650 = vst.msk [vmem:[#allocation2 + $0x3] sm:$0x8] %vm1649, %v1616
  %1651 = vst.msk [vmem:[#allocation2 + $0x23] sm:$0x8] %vm1649, %v1622
  %1652 = vst.msk [vmem:[#allocation2 + $0x4] sm:$0x8] %vm1649, %v1632
  %1653 = vst.msk [vmem:[#allocation2 + $0x24] sm:$0x8] %vm1649, %v1634
  %vm1654 = vcmask 126980
  %1655 = vst.msk [vmem:[#allocation2 + $0x4] sm:$0x10] %vm1654, %v1616
  %1656 = vst.msk [vmem:[#allocation2 + $0x24] sm:$0x10] %vm1654, %v1622
  %1657 = vst.msk [vmem:[#allocation2 + $0x5] sm:$0x10] %vm1654, %v1632
  %1658 = vst.msk [vmem:[#allocation2 + $0x25] sm:$0x10] %vm1654, %v1634
  %vm1659 = vcmask 128005
  %1660 = vst.msk [vmem:[#allocation2 + $0x5] sm:$0x20] %vm1659, %v1616
  %1661 = vst.msk [vmem:[#allocation2 + $0x25] sm:$0x20] %vm1659, %v1622
  %1662 = vst.msk [vmem:[#allocation2 + $0x6] sm:$0x20] %vm1659, %v1632
  %1663 = vst.msk [vmem:[#allocation2 + $0x26] sm:$0x20] %vm1659, %v1634
  %vm1664 = vcmask 129030
  %1665 = vst.msk [vmem:[#allocation2 + $0x6] sm:$0x40] %vm1664, %v1616
  %1666 = vst.msk [vmem:[#allocation2 + $0x26] sm:$0x40] %vm1664, %v1622
  %1667 = vst.msk [vmem:[#allocation2 + $0x7] sm:$0x40] %vm1664, %v1632
  %1668 = vst.msk [vmem:[#allocation2 + $0x27] sm:$0x40] %vm1664, %v1634
  %vm1669 = vcmask 130055
  %1670 = vst.msk [vmem:[#allocation2 + $0x7] sm:$0x80] %vm1669, %v1616
  %1671 = vst.msk [vmem:[#allocation2 + $0x27] sm:$0x80] %vm1669, %v1622
  %1672 = vst.msk [vmem:[#allocation2 + $0x8] sm:$0x80] %vm1669, %v1632
  %1673 = vst.msk [vmem:[#allocation2 + $0x28] sm:$0x80] %vm1669, %v1634
  %1674 = vst.msk [vmem:[#allocation2 + $0x10] sm:$0x1] %vm1626, %v1619
  %1675 = vst.msk [vmem:[#allocation2 + $0x30] sm:$0x1] %vm1626, %v1625
  %1678 = vrot.lane.b32.xlu0 %v1619, 112
  %v1679 = vpop.permute.xlu0 %1678
  %1680 = vrot.lane.b32.xlu0 %v1625, 112
  %v1681 = vpop.permute.xlu0 %1680
  %1684 = vst.msk [vmem:[#allocation2 + $0x11] sm:$0x1] %vm1626, %v1679
  %1685 = vst.msk [vmem:[#allocation2 + $0x31] sm:$0x1] %vm1626, %v1681
  %1686 = vst.msk [vmem:[#allocation2 + $0x11] sm:$0x2] %vm1639, %v1619
  %1687 = vst.msk [vmem:[#allocation2 + $0x31] sm:$0x2] %vm1639, %v1625
  %1688 = vst.msk [vmem:[#allocation2 + $0x12] sm:$0x2] %vm1639, %v1679
  %1689 = vst.msk [vmem:[#allocation2 + $0x32] sm:$0x2] %vm1639, %v1681
  %1690 = vst.msk [vmem:[#allocation2 + $0x12] sm:$0x4] %vm1644, %v1619
  %1691 = vst.msk [vmem:[#allocation2 + $0x32] sm:$0x4] %vm1644, %v1625
  %1692 = vst.msk [vmem:[#allocation2 + $0x13] sm:$0x4] %vm1644, %v1679
  %1693 = vst.msk [vmem:[#allocation2 + $0x33] sm:$0x4] %vm1644, %v1681
  %1694 = vst.msk [vmem:[#allocation2 + $0x13] sm:$0x8] %vm1649, %v1619
  %1695 = vst.msk [vmem:[#allocation2 + $0x33] sm:$0x8] %vm1649, %v1625
  %1696 = vst.msk [vmem:[#allocation2 + $0x14] sm:$0x8] %vm1649, %v1679
  %1697 = vst.msk [vmem:[#allocation2 + $0x34] sm:$0x8] %vm1649, %v1681
  %1698 = vst.msk [vmem:[#allocation2 + $0x14] sm:$0x10] %vm1654, %v1619
  %1699 = vst.msk [vmem:[#allocation2 + $0x34] sm:$0x10] %vm1654, %v1625
  %1700 = vst.msk [vmem:[#allocation2 + $0x15] sm:$0x10] %vm1654, %v1679
  %1701 = vst.msk [vmem:[#allocation2 + $0x35] sm:$0x10] %vm1654, %v1681
  %1702 = vst.msk [vmem:[#allocation2 + $0x15] sm:$0x20] %vm1659, %v1619
  %1703 = vst.msk [vmem:[#allocation2 + $0x35] sm:$0x20] %vm1659, %v1625
  %1704 = vst.msk [vmem:[#allocation2 + $0x16] sm:$0x20] %vm1659, %v1679
  %1705 = vst.msk [vmem:[#allocation2 + $0x36] sm:$0x20] %vm1659, %v1681
  %1706 = vst.msk [vmem:[#allocation2 + $0x16] sm:$0x40] %vm1664, %v1619
  %1707 = vst.msk [vmem:[#allocation2 + $0x36] sm:$0x40] %vm1664, %v1625
  %1708 = vst.msk [vmem:[#allocation2 + $0x17] sm:$0x40] %vm1664, %v1679
  %1709 = vst.msk [vmem:[#allocation2 + $0x37] sm:$0x40] %vm1664, %v1681
  %1710 = vst.msk [vmem:[#allocation2 + $0x17] sm:$0x80] %vm1669, %v1619
  %1711 = vst.msk [vmem:[#allocation2 + $0x37] sm:$0x80] %vm1669, %v1625
  %1712 = vst.msk [vmem:[#allocation2 + $0x18] sm:$0x80] %vm1669, %v1679
  %1713 = vst.msk [vmem:[#allocation2 + $0x38] sm:$0x80] %vm1669, %v1681
  %v1714 = vld [vmem:[#allocation2] sm:$0xff]
  %v1715 = vld [vmem:[#allocation2 + $0x8] sm:$0xff]
  %v1716 = vld [vmem:[#allocation2 + $0x10] sm:$0xff]
  %v1717 = vld [vmem:[#allocation2 + $0x18] sm:$0xff]
  %v1718 = vld [vmem:[#allocation2 + $0x20] sm:$0xff]
  %v1719 = vld [vmem:[#allocation2 + $0x28] sm:$0xff]
  %v1720 = vld [vmem:[#allocation2 + $0x30] sm:$0xff]
  %v1721 = vld [vmem:[#allocation2 + $0x38] sm:$0xff]
  %v1722 = vld [vmem:[%s3] sm:$0xff]
  %v1723 = vld [vmem:[%s3 + $0x8] sm:$0xff]
  %v1724 = vld [vmem:[%s3 + $0x10] sm:$0xff]
  %v1725 = vld [vmem:[%s3 + $0x18] sm:$0xff]
  %v1726 = vld [vmem:[%s3 + $0x20] sm:$0xff]
  %v1727 = vld [vmem:[%s3 + $0x28] sm:$0xff]
  %v1728 = vld [vmem:[%s3 + $0x30] sm:$0xff]
  %v1729 = vld [vmem:[%s3 + $0x38] sm:$0xff]
  %v1730 = vld [vmem:[%s4] sm:$0xff]
  %v1731 = vld [vmem:[%s4 + $0x8] sm:$0xff]
  %vm1732 = vcmask 523264
  %v1734 = vsel %vm1732, %v1722, 0
  %v1737 = vsel %vm1732, %v1723, 0
  %v1740 = vsel %vm1732, %v1724, 0
  %v1743 = vsel %vm1732, %v1725, 0
  %v1746 = vsel %vm1732, %v1730, 0
  %v1749 = vsel %vm1732, %v1731, 0
  %1751 = vmatprep.subr.mxu0 0.0
  %1752 = vmatpush1.xpose.msra.mxu0 %v1746
  %1753 = vmatprep.subr.mxu0 0.0
  %1754 = vmatpush1.xpose.msra.mxu0 %v1749
  %1755 = vmatprep.subr.mxu0 0.0
  %1756 = vmatpush1.xpose.msra.mxu0 0.0
  %1757 = vmatprep.subr.mxu0 0.0
  %1758 = vmatpush1.xpose.msra.mxu0 0.0
  %1759 = vmatprep.subr.mxu0 0.0
  %1760 = vmatpush1.xpose.msra.mxu0 0.0
  %1761 = vmatprep.subr.mxu0 0.0
  %1762 = vmatpush1.xpose.msra.mxu0 0.0
  %1763 = vmatprep.subr.mxu0 0.0
  %1764 = vmatpush1.xpose.msra.mxu0 0.0
  %1765 = vmatprep.subr.mxu0 0.0
  %1766 = vmatpush1.xpose.msra.mxu0 0.0
  %1767 = vmatprep.subr.mxu0 0.0
  %1768 = vmatpush1.xpose.msra.mxu0 0.0
  %1769 = vmatprep.subr.mxu0 0.0
  %1770 = vmatpush1.xpose.msra.mxu0 0.0
  %1771 = vmatprep.subr.mxu0 0.0
  %1772 = vmatpush1.xpose.msra.mxu0 0.0
  %1773 = vmatprep.subr.mxu0 0.0
  %1774 = vmatpush1.xpose.msra.mxu0 0.0
  %1775 = vmatprep.subr.mxu0 0.0
  %1776 = vmatpush1.xpose.msra.mxu0 0.0
  %1777 = vmatprep.subr.mxu0 0.0
  %1778 = vmatpush1.xpose.msra.mxu0 0.0
  %1779 = vmatprep.subr.mxu0 0.0
  %1780 = vmatpush1.xpose.msra.mxu0 0.0
  %1781 = vmatprep.subr.mxu0 0.0
  %1782 = vmatpush1.xpose.msra.mxu0 0.0
  %1783 = vmatprep.subr.mxu0 0.0
  %1784 = vmatpush1.xpose.msra.mxu0 0.0
  %1785 = vmatprep.subr.mxu0 0.0
  %1786 = vmatpush1.xpose.msra.mxu0 0.0
  %1787 = vmatprep.subr.mxu0 0.0
  %1788 = vmatpush1.xpose.msra.mxu0 0.0
  %1789 = vmatprep.subr.mxu0 0.0
  %1790 = vmatpush1.xpose.msra.mxu0 0.0
  %1791 = vmatprep.subr.mxu0 0.0
  %1792 = vmatpush1.xpose.msra.mxu0 0.0
  %1793 = vmatprep.subr.mxu0 0.0
  %1794 = vmatpush1.xpose.msra.mxu0 0.0
  %1795 = vmatprep.subr.mxu0 0.0
  %1796 = vmatpush1.xpose.msra.mxu0 0.0
  %1797 = vmatprep.subr.mxu0 0.0
  %1798 = vmatpush1.xpose.msra.mxu0 0.0
  %1799 = vmatprep.subr.mxu0 0.0
  %1800 = vmatpush1.xpose.msra.mxu0 0.0
  %1801 = vmatprep.subr.mxu0 0.0
  %1802 = vmatpush1.xpose.msra.mxu0 0.0
  %1803 = vmatprep.subr.mxu0 0.0
  %1804 = vmatpush1.xpose.msra.mxu0 0.0
  %1805 = vmatprep.subr.mxu0 0.0
  %1806 = vmatpush1.xpose.msra.mxu0 0.0
  %1807 = vmatprep.subr.mxu0 0.0
  %1808 = vmatpush1.xpose.msra.mxu0 0.0
  %1809 = vmatprep.subr.mxu0 0.0
  %1810 = vmatpush1.xpose.msra.mxu0 0.0
  %1811 = vmatprep.subr.mxu0 0.0
  %1812 = vmatpush1.xpose.msra.mxu0 0.0
  %1813 = vmatprep.subr.mxu0 0.0
  %1814 = vmatpush1.xpose.msra.mxu0 0.0
  %1815 = vmatprep.mubr.f32.mxu0 0.0
  %1816 = vmatmul.mubr.f32.gmra.mrb[0].mxu0 %v1734
  %v1817 = vpop.f32.mrb[0].mxu0
  %v1818 = vadd.f32 0.0, %v1817
  %v1819 = vpop.f32.mrb[0].mxu0
  %1820 = vmatprep.mubr.f32.mxu0 0.0
  %1821 = vmatmul.mubr.f32.gmra.mrb[0].mxu0 %v1737
  %v1822 = vpop.f32.mrb[0].mxu0
  %v1823 = vadd.f32 0.0, %v1822
  %v1824 = vpop.f32.mrb[0].mxu0
  %1825 = vmatprep.mubr.f32.mxu0 0.0
  %1826 = vmatmul.mubr.f32.gmra.mrb[0].mxu0 %v1740
  %v1827 = vpop.f32.mrb[0].mxu0
  %v1828 = vadd.f32 0.0, %v1827
  %v1829 = vpop.f32.mrb[0].mxu0
  %1830 = vmatprep.mubr.f32.mxu0 0.0
  %1831 = vmatmul.mubr.f32.gmra.mrb[0].mxu0 %v1743
  %v1832 = vpop.f32.mrb[0].mxu0
  %v1833 = vadd.f32 0.0, %v1832
  %v1834 = vpop.f32.mrb[0].mxu0
  %1835 = vdwg.mxu0
  %v1837 = vsel %vm1732, %v1726, 0
  %v1840 = vsel %vm1732, %v1727, 0
  %v1843 = vsel %vm1732, %v1728, 0
  %v1846 = vsel %vm1732, %v1729, 0
  %1848 = vmatprep.subr.mxu0 0.0
  %1849 = vmatpush1.xpose.msra.mxu0 %v1746
  %1850 = vmatprep.subr.mxu0 0.0
  %1851 = vmatpush1.xpose.msra.mxu0 %v1749
  %1852 = vmatprep.subr.mxu0 0.0
  %1853 = vmatpush1.xpose.msra.mxu0 0.0
  %1854 = vmatprep.subr.mxu0 0.0
  %1855 = vmatpush1.xpose.msra.mxu0 0.0
  %1856 = vmatprep.subr.mxu0 0.0
  %1857 = vmatpush1.xpose.msra.mxu0 0.0
  %1858 = vmatprep.subr.mxu0 0.0
  %1859 = vmatpush1.xpose.msra.mxu0 0.0
  %1860 = vmatprep.subr.mxu0 0.0
  %1861 = vmatpush1.xpose.msra.mxu0 0.0
  %1862 = vmatprep.subr.mxu0 0.0
  %1863 = vmatpush1.xpose.msra.mxu0 0.0
  %1864 = vmatprep.subr.mxu0 0.0
  %1865 = vmatpush1.xpose.msra.mxu0 0.0
  %1866 = vmatprep.subr.mxu0 0.0
  %1867 = vmatpush1.xpose.msra.mxu0 0.0
  %1868 = vmatprep.subr.mxu0 0.0
  %1869 = vmatpush1.xpose.msra.mxu0 0.0
  %1870 = vmatprep.subr.mxu0 0.0
  %1871 = vmatpush1.xpose.msra.mxu0 0.0
  %1872 = vmatprep.subr.mxu0 0.0
  %1873 = vmatpush1.xpose.msra.mxu0 0.0
  %1874 = vmatprep.subr.mxu0 0.0
  %1875 = vmatpush1.xpose.msra.mxu0 0.0
  %1876 = vmatprep.subr.mxu0 0.0
  %1877 = vmatpush1.xpose.msra.mxu0 0.0
  %1878 = vmatprep.subr.mxu0 0.0
  %1879 = vmatpush1.xpose.msra.mxu0 0.0
  %1880 = vmatprep.subr.mxu0 0.0
  %1881 = vmatpush1.xpose.msra.mxu0 0.0
  %1882 = vmatprep.subr.mxu0 0.0
  %1883 = vmatpush1.xpose.msra.mxu0 0.0
  %1884 = vmatprep.subr.mxu0 0.0
  %1885 = vmatpush1.xpose.msra.mxu0 0.0
  %1886 = vmatprep.subr.mxu0 0.0
  %1887 = vmatpush1.xpose.msra.mxu0 0.0
  %1888 = vmatprep.subr.mxu0 0.0
  %1889 = vmatpush1.xpose.msra.mxu0 0.0
  %1890 = vmatprep.subr.mxu0 0.0
  %1891 = vmatpush1.xpose.msra.mxu0 0.0
  %1892 = vmatprep.subr.mxu0 0.0
  %1893 = vmatpush1.xpose.msra.mxu0 0.0
  %1894 = vmatprep.subr.mxu0 0.0
  %1895 = vmatpush1.xpose.msra.mxu0 0.0
  %1896 = vmatprep.subr.mxu0 0.0
  %1897 = vmatpush1.xpose.msra.mxu0 0.0
  %1898 = vmatprep.subr.mxu0 0.0
  %1899 = vmatpush1.xpose.msra.mxu0 0.0
  %1900 = vmatprep.subr.mxu0 0.0
  %1901 = vmatpush1.xpose.msra.mxu0 0.0
  %1902 = vmatprep.subr.mxu0 0.0
  %1903 = vmatpush1.xpose.msra.mxu0 0.0
  %1904 = vmatprep.subr.mxu0 0.0
  %1905 = vmatpush1.xpose.msra.mxu0 0.0
  %1906 = vmatprep.subr.mxu0 0.0
  %1907 = vmatpush1.xpose.msra.mxu0 0.0
  %1908 = vmatprep.subr.mxu0 0.0
  %1909 = vmatpush1.xpose.msra.mxu0 0.0
  %1910 = vmatprep.subr.mxu0 0.0
  %1911 = vmatpush1.xpose.msra.mxu0 0.0
  %1912 = vmatprep.mubr.f32.mxu0 0.0
  %1913 = vmatmul.mubr.f32.gmra.mrb[0].mxu0 %v1837
  %v1914 = vpop.f32.mrb[0].mxu0
  %v1915 = vadd.f32 0.0, %v1914
  %v1916 = vpop.f32.mrb[0].mxu0
  %1917 = vmatprep.mubr.f32.mxu0 0.0
  %1918 = vmatmul.mubr.f32.gmra.mrb[0].mxu0 %v1840
  %v1919 = vpop.f32.mrb[0].mxu0
  %v1920 = vadd.f32 0.0, %v1919
  %v1921 = vpop.f32.mrb[0].mxu0
  %1922 = vmatprep.mubr.f32.mxu0 0.0
  %1923 = vmatmul.mubr.f32.gmra.mrb[0].mxu0 %v1843
  %v1924 = vpop.f32.mrb[0].mxu0
  %v1925 = vadd.f32 0.0, %v1924
  %v1926 = vpop.f32.mrb[0].mxu0
  %1927 = vmatprep.mubr.f32.mxu0 0.0
  %1928 = vmatmul.mubr.f32.gmra.mrb[0].mxu0 %v1846
  %v1929 = vpop.f32.mrb[0].mxu0
  %v1930 = vadd.f32 0.0, %v1929
  %v1931 = vpop.f32.mrb[0].mxu0
  %1932 = vdwg.mxu0
  %v1934 = vsel %vm99, %v35, 0
  %v1937 = vsel %vm99, %v36, 0
  %v1940 = vsel %vm99, %v37, 0
  %v1943 = vsel %vm99, %v38, 0
  %1945 = vmatprep.subr.mxu0 0.0
  %1946 = vmatpush1.msra.mxu0 %v1818
  %1947 = vmatprep.subr.mxu0 0.0
  %1948 = vmatpush1.msra.mxu0 %v1823
  %1949 = vmatprep.subr.mxu0 0.0
  %1950 = vmatpush1.msra.mxu0 %v1828
  %1951 = vmatprep.subr.mxu0 0.0
  %1952 = vmatpush1.msra.mxu0 %v1833
  %1953 = vmatprep.subr.mxu0 0.0
  %1954 = vmatpush1.msra.mxu0 0.0
  %1955 = vmatprep.subr.mxu0 0.0
  %1956 = vmatpush1.msra.mxu0 0.0
  %1957 = vmatprep.subr.mxu0 0.0
  %1958 = vmatpush1.msra.mxu0 0.0
  %1959 = vmatprep.subr.mxu0 0.0
  %1960 = vmatpush1.msra.mxu0 0.0
  %1961 = vmatprep.subr.mxu0 0.0
  %1962 = vmatpush1.msra.mxu0 0.0
  %1963 = vmatprep.subr.mxu0 0.0
  %1964 = vmatpush1.msra.mxu0 0.0
  %1965 = vmatprep.subr.mxu0 0.0
  %1966 = vmatpush1.msra.mxu0 0.0
  %1967 = vmatprep.subr.mxu0 0.0
  %1968 = vmatpush1.msra.mxu0 0.0
  %1969 = vmatprep.subr.mxu0 0.0
  %1970 = vmatpush1.msra.mxu0 0.0
  %1971 = vmatprep.subr.mxu0 0.0
  %1972 = vmatpush1.msra.mxu0 0.0
  %1973 = vmatprep.subr.mxu0 0.0
  %1974 = vmatpush1.msra.mxu0 0.0
  %1975 = vmatprep.subr.mxu0 0.0
  %1976 = vmatpush1.msra.mxu0 0.0
  %1977 = vmatprep.subr.mxu0 0.0
  %1978 = vmatpush1.msra.mxu0 0.0
  %1979 = vmatprep.subr.mxu0 0.0
  %1980 = vmatpush1.msra.mxu0 0.0
  %1981 = vmatprep.subr.mxu0 0.0
  %1982 = vmatpush1.msra.mxu0 0.0
  %1983 = vmatprep.subr.mxu0 0.0
  %1984 = vmatpush1.msra.mxu0 0.0
  %1985 = vmatprep.subr.mxu0 0.0
  %1986 = vmatpush1.msra.mxu0 0.0
  %1987 = vmatprep.subr.mxu0 0.0
  %1988 = vmatpush1.msra.mxu0 0.0
  %1989 = vmatprep.subr.mxu0 0.0
  %1990 = vmatpush1.msra.mxu0 0.0
  %1991 = vmatprep.subr.mxu0 0.0
  %1992 = vmatpush1.msra.mxu0 0.0
  %1993 = vmatprep.subr.mxu0 0.0
  %1994 = vmatpush1.msra.mxu0 0.0
  %1995 = vmatprep.subr.mxu0 0.0
  %1996 = vmatpush1.msra.mxu0 0.0
  %1997 = vmatprep.subr.mxu0 0.0
  %1998 = vmatpush1.msra.mxu0 0.0
  %1999 = vmatprep.subr.mxu0 0.0
  %2000 = vmatpush1.msra.mxu0 0.0
  %2001 = vmatprep.subr.mxu0 0.0
  %2002 = vmatpush1.msra.mxu0 0.0
  %2003 = vmatprep.subr.mxu0 0.0
  %2004 = vmatpush1.msra.mxu0 0.0
  %2005 = vmatprep.subr.mxu0 0.0
  %2006 = vmatpush1.msra.mxu0 0.0
  %2007 = vmatprep.subr.mxu0 0.0
  %2008 = vmatpush1.msra.mxu0 0.0
  %2009 = vmatprep.mubr.f32.mxu0 0.0
  %2010 = vmatmul.mubr.f32.gmra.mrb[0].mxu0 %v1934
  %v2011 = vpop.f32.mrb[0].mxu0
  %v2012 = vadd.f32 0.0, %v2011
  %v2013 = vpop.f32.mrb[0].mxu0
  %2014 = vmatprep.mubr.f32.mxu0 0.0
  %2015 = vmatmul.mubr.f32.gmra.mrb[0].mxu0 %v1937
  %v2016 = vpop.f32.mrb[0].mxu0
  %v2017 = vadd.f32 0.0, %v2016
  %v2018 = vpop.f32.mrb[0].mxu0
  %2019 = vmatprep.mubr.f32.mxu0 0.0
  %2020 = vmatmul.mubr.f32.gmra.mrb[0].mxu0 %v1940
  %v2021 = vpop.f32.mrb[0].mxu0
  %v2022 = vadd.f32 0.0, %v2021
  %v2023 = vpop.f32.mrb[0].mxu0
  %2024 = vmatprep.mubr.f32.mxu0 0.0
  %2025 = vmatmul.mubr.f32.gmra.mrb[0].mxu0 %v1943
  %v2026 = vpop.f32.mrb[0].mxu0
  %v2027 = vadd.f32 0.0, %v2026
  %v2028 = vpop.f32.mrb[0].mxu0
  %2029 = vdwg.mxu0
  %2030 = vmatprep.subr.mxu0 0.0
  %2031 = vmatpush1.msra.mxu0 %v1915
  %2032 = vmatprep.subr.mxu0 0.0
  %2033 = vmatpush1.msra.mxu0 %v1920
  %2034 = vmatprep.subr.mxu0 0.0
  %2035 = vmatpush1.msra.mxu0 %v1925
  %2036 = vmatprep.subr.mxu0 0.0
  %2037 = vmatpush1.msra.mxu0 %v1930
  %2038 = vmatprep.subr.mxu0 0.0
  %2039 = vmatpush1.msra.mxu0 0.0
  %2040 = vmatprep.subr.mxu0 0.0
  %2041 = vmatpush1.msra.mxu0 0.0
  %2042 = vmatprep.subr.mxu0 0.0
  %2043 = vmatpush1.msra.mxu0 0.0
  %2044 = vmatprep.subr.mxu0 0.0
  %2045 = vmatpush1.msra.mxu0 0.0
  %2046 = vmatprep.subr.mxu0 0.0
  %2047 = vmatpush1.msra.mxu0 0.0
  %2048 = vmatprep.subr.mxu0 0.0
  %2049 = vmatpush1.msra.mxu0 0.0
  %2050 = vmatprep.subr.mxu0 0.0
  %2051 = vmatpush1.msra.mxu0 0.0
  %2052 = vmatprep.subr.mxu0 0.0
  %2053 = vmatpush1.msra.mxu0 0.0
  %2054 = vmatprep.subr.mxu0 0.0
  %2055 = vmatpush1.msra.mxu0 0.0
  %2056 = vmatprep.subr.mxu0 0.0
  %2057 = vmatpush1.msra.mxu0 0.0
  %2058 = vmatprep.subr.mxu0 0.0
  %2059 = vmatpush1.msra.mxu0 0.0
  %2060 = vmatprep.subr.mxu0 0.0
  %2061 = vmatpush1.msra.mxu0 0.0
  %2062 = vmatprep.subr.mxu0 0.0
  %2063 = vmatpush1.msra.mxu0 0.0
  %2064 = vmatprep.subr.mxu0 0.0
  %2065 = vmatpush1.msra.mxu0 0.0
  %2066 = vmatprep.subr.mxu0 0.0
  %2067 = vmatpush1.msra.mxu0 0.0
  %2068 = vmatprep.subr.mxu0 0.0
  %2069 = vmatpush1.msra.mxu0 0.0
  %2070 = vmatprep.subr.mxu0 0.0
  %2071 = vmatpush1.msra.mxu0 0.0
  %2072 = vmatprep.subr.mxu0 0.0
  %2073 = vmatpush1.msra.mxu0 0.0
  %2074 = vmatprep.subr.mxu0 0.0
  %2075 = vmatpush1.msra.mxu0 0.0
  %2076 = vmatprep.subr.mxu0 0.0
  %2077 = vmatpush1.msra.mxu0 0.0
  %2078 = vmatprep.subr.mxu0 0.0
  %2079 = vmatpush1.msra.mxu0 0.0
  %2080 = vmatprep.subr.mxu0 0.0
  %2081 = vmatpush1.msra.mxu0 0.0
  %2082 = vmatprep.subr.mxu0 0.0
  %2083 = vmatpush1.msra.mxu0 0.0
  %2084 = vmatprep.subr.mxu0 0.0
  %2085 = vmatpush1.msra.mxu0 0.0
  %2086 = vmatprep.subr.mxu0 0.0
  %2087 = vmatpush1.msra.mxu0 0.0
  %2088 = vmatprep.subr.mxu0 0.0
  %2089 = vmatpush1.msra.mxu0 0.0
  %2090 = vmatprep.subr.mxu0 0.0
  %2091 = vmatpush1.msra.mxu0 0.0
  %2092 = vmatprep.subr.mxu0 0.0
  %2093 = vmatpush1.msra.mxu0 0.0
  %2094 = vmatprep.mubr.f32.mxu0 0.0
  %2095 = vmatmul.mubr.f32.gmra.mrb[0].mxu0 %v1934
  %v2096 = vpop.f32.mrb[0].mxu0
  %v2097 = vadd.f32 0.0, %v2096
  %v2098 = vpop.f32.mrb[0].mxu0
  %2099 = vmatprep.mubr.f32.mxu0 0.0
  %2100 = vmatmul.mubr.f32.gmra.mrb[0].mxu0 %v1937
  %v2101 = vpop.f32.mrb[0].mxu0
  %v2102 = vadd.f32 0.0, %v2101
  %v2103 = vpop.f32.mrb[0].mxu0
  %2104 = vmatprep.mubr.f32.mxu0 0.0
  %2105 = vmatmul.mubr.f32.gmra.mrb[0].mxu0 %v1940
  %v2106 = vpop.f32.mrb[0].mxu0
  %v2107 = vadd.f32 0.0, %v2106
  %v2108 = vpop.f32.mrb[0].mxu0
  %2109 = vmatprep.mubr.f32.mxu0 0.0
  %2110 = vmatmul.mubr.f32.gmra.mrb[0].mxu0 %v1943
  %v2111 = vpop.f32.mrb[0].mxu0
  %v2112 = vadd.f32 0.0, %v2111
  %v2113 = vpop.f32.mrb[0].mxu0
  %2114 = vdwg.mxu0
  %v2116 = vsel %vm99, %v31, 0
  %v2119 = vsel %vm99, %v32, 0
  %v2122 = vsel %vm99, %v33, 0
  %v2125 = vsel %vm99, %v34, 0
  %2127 = vmatprep.subr.mxu0 0.0
  %2128 = vmatpush1.msra.mxu0 %v1714
  %2129 = vmatprep.subr.mxu0 0.0
  %2130 = vmatpush1.msra.mxu0 %v1715
  %2131 = vmatprep.subr.mxu0 0.0
  %2132 = vmatpush1.msra.mxu0 %v1716
  %2133 = vmatprep.subr.mxu0 0.0
  %2134 = vmatpush1.msra.mxu0 %v1717
  %2135 = vmatprep.subr.mxu0 0.0
  %2136 = vmatpush1.msra.mxu0 0.0
  %2137 = vmatprep.subr.mxu0 0.0
  %2138 = vmatpush1.msra.mxu0 0.0
  %2139 = vmatprep.subr.mxu0 0.0
  %2140 = vmatpush1.msra.mxu0 0.0
  %2141 = vmatprep.subr.mxu0 0.0
  %2142 = vmatpush1.msra.mxu0 0.0
  %2143 = vmatprep.subr.mxu0 0.0
  %2144 = vmatpush1.msra.mxu0 0.0
  %2145 = vmatprep.subr.mxu0 0.0
  %2146 = vmatpush1.msra.mxu0 0.0
  %2147 = vmatprep.subr.mxu0 0.0
  %2148 = vmatpush1.msra.mxu0 0.0
  %2149 = vmatprep.subr.mxu0 0.0
  %2150 = vmatpush1.msra.mxu0 0.0
  %2151 = vmatprep.subr.mxu0 0.0
  %2152 = vmatpush1.msra.mxu0 0.0
  %2153 = vmatprep.subr.mxu0 0.0
  %2154 = vmatpush1.msra.mxu0 0.0
  %2155 = vmatprep.subr.mxu0 0.0
  %2156 = vmatpush1.msra.mxu0 0.0
  %2157 = vmatprep.subr.mxu0 0.0
  %2158 = vmatpush1.msra.mxu0 0.0
  %2159 = vmatprep.subr.mxu0 0.0
  %2160 = vmatpush1.msra.mxu0 0.0
  %2161 = vmatprep.subr.mxu0 0.0
  %2162 = vmatpush1.msra.mxu0 0.0
  %2163 = vmatprep.subr.mxu0 0.0
  %2164 = vmatpush1.msra.mxu0 0.0
  %2165 = vmatprep.subr.mxu0 0.0
  %2166 = vmatpush1.msra.mxu0 0.0
  %2167 = vmatprep.subr.mxu0 0.0
  %2168 = vmatpush1.msra.mxu0 0.0
  %2169 = vmatprep.subr.mxu0 0.0
  %2170 = vmatpush1.msra.mxu0 0.0
  %2171 = vmatprep.subr.mxu0 0.0
  %2172 = vmatpush1.msra.mxu0 0.0
  %2173 = vmatprep.subr.mxu0 0.0
  %2174 = vmatpush1.msra.mxu0 0.0
  %2175 = vmatprep.subr.mxu0 0.0
  %2176 = vmatpush1.msra.mxu0 0.0
  %2177 = vmatprep.subr.mxu0 0.0
  %2178 = vmatpush1.msra.mxu0 0.0
  %2179 = vmatprep.subr.mxu0 0.0
  %2180 = vmatpush1.msra.mxu0 0.0
  %2181 = vmatprep.subr.mxu0 0.0
  %2182 = vmatpush1.msra.mxu0 0.0
  %2183 = vmatprep.subr.mxu0 0.0
  %2184 = vmatpush1.msra.mxu0 0.0
  %2185 = vmatprep.subr.mxu0 0.0
  %2186 = vmatpush1.msra.mxu0 0.0
  %2187 = vmatprep.subr.mxu0 0.0
  %2188 = vmatpush1.msra.mxu0 0.0
  %2189 = vmatprep.subr.mxu0 0.0
  %2190 = vmatpush1.msra.mxu0 0.0
  %2191 = vmatprep.mubr.f32.mxu0 0.0
  %2192 = vmatmul.mubr.f32.gmra.mrb[0].mxu0 %v2116
  %v2193 = vpop.f32.mrb[0].mxu0
  %v2194 = vadd.f32 %v2012, %v2193
  %v2195 = vpop.f32.mrb[0].mxu0
  %2196 = vmatprep.mubr.f32.mxu0 0.0
  %2197 = vmatmul.mubr.f32.gmra.mrb[0].mxu0 %v2119
  %v2198 = vpop.f32.mrb[0].mxu0
  %v2199 = vadd.f32 %v2017, %v2198
  %v2200 = vpop.f32.mrb[0].mxu0
  %2201 = vmatprep.mubr.f32.mxu0 0.0
  %2202 = vmatmul.mubr.f32.gmra.mrb[0].mxu0 %v2122
  %v2203 = vpop.f32.mrb[0].mxu0
  %v2204 = vadd.f32 %v2022, %v2203
  %v2205 = vpop.f32.mrb[0].mxu0
  %2206 = vmatprep.mubr.f32.mxu0 0.0
  %2207 = vmatmul.mubr.f32.gmra.mrb[0].mxu0 %v2125
  %v2208 = vpop.f32.mrb[0].mxu0
  %v2209 = vadd.f32 %v2027, %v2208
  %v2210 = vpop.f32.mrb[0].mxu0
  %2211 = vdwg.mxu0
  %2212 = vmatprep.subr.mxu0 0.0
  %2213 = vmatpush1.msra.mxu0 %v1718
  %2214 = vmatprep.subr.mxu0 0.0
  %2215 = vmatpush1.msra.mxu0 %v1719
  %2216 = vmatprep.subr.mxu0 0.0
  %2217 = vmatpush1.msra.mxu0 %v1720
  %2218 = vmatprep.subr.mxu0 0.0
  %2219 = vmatpush1.msra.mxu0 %v1721
  %2220 = vmatprep.subr.mxu0 0.0
  %2221 = vmatpush1.msra.mxu0 0.0
  %2222 = vmatprep.subr.mxu0 0.0
  %2223 = vmatpush1.msra.mxu0 0.0
  %2224 = vmatprep.subr.mxu0 0.0
  %2225 = vmatpush1.msra.mxu0 0.0
  %2226 = vmatprep.subr.mxu0 0.0
  %2227 = vmatpush1.msra.mxu0 0.0
  %2228 = vmatprep.subr.mxu0 0.0
  %2229 = vmatpush1.msra.mxu0 0.0
  %2230 = vmatprep.subr.mxu0 0.0
  %2231 = vmatpush1.msra.mxu0 0.0
  %2232 = vmatprep.subr.mxu0 0.0
  %2233 = vmatpush1.msra.mxu0 0.0
  %2234 = vmatprep.subr.mxu0 0.0
  %2235 = vmatpush1.msra.mxu0 0.0
  %2236 = vmatprep.subr.mxu0 0.0
  %2237 = vmatpush1.msra.mxu0 0.0
  %2238 = vmatprep.subr.mxu0 0.0
  %2239 = vmatpush1.msra.mxu0 0.0
  %2240 = vmatprep.subr.mxu0 0.0
  %2241 = vmatpush1.msra.mxu0 0.0
  %2242 = vmatprep.subr.mxu0 0.0
  %2243 = vmatpush1.msra.mxu0 0.0
  %2244 = vmatprep.subr.mxu0 0.0
  %2245 = vmatpush1.msra.mxu0 0.0
  %2246 = vmatprep.subr.mxu0 0.0
  %2247 = vmatpush1.msra.mxu0 0.0
  %2248 = vmatprep.subr.mxu0 0.0
  %2249 = vmatpush1.msra.mxu0 0.0
  %2250 = vmatprep.subr.mxu0 0.0
  %2251 = vmatpush1.msra.mxu0 0.0
  %2252 = vmatprep.subr.mxu0 0.0
  %2253 = vmatpush1.msra.mxu0 0.0
  %2254 = vmatprep.subr.mxu0 0.0
  %2255 = vmatpush1.msra.mxu0 0.0
  %2256 = vmatprep.subr.mxu0 0.0
  %2257 = vmatpush1.msra.mxu0 0.0
  %2258 = vmatprep.subr.mxu0 0.0
  %2259 = vmatpush1.msra.mxu0 0.0
  %2260 = vmatprep.subr.mxu0 0.0
  %2261 = vmatpush1.msra.mxu0 0.0
  %2262 = vmatprep.subr.mxu0 0.0
  %2263 = vmatpush1.msra.mxu0 0.0
  %2264 = vmatprep.subr.mxu0 0.0
  %2265 = vmatpush1.msra.mxu0 0.0
  %2266 = vmatprep.subr.mxu0 0.0
  %2267 = vmatpush1.msra.mxu0 0.0
  %2268 = vmatprep.subr.mxu0 0.0
  %2269 = vmatpush1.msra.mxu0 0.0
  %2270 = vmatprep.subr.mxu0 0.0
  %2271 = vmatpush1.msra.mxu0 0.0
  %2272 = vmatprep.subr.mxu0 0.0
  %2273 = vmatpush1.msra.mxu0 0.0
  %2274 = vmatprep.subr.mxu0 0.0
  %2275 = vmatpush1.msra.mxu0 0.0
  %2276 = vmatprep.mubr.f32.mxu0 0.0
  %2277 = vmatmul.mubr.f32.gmra.mrb[0].mxu0 %v2116
  %v2278 = vpop.f32.mrb[0].mxu0
  %v2279 = vadd.f32 %v2097, %v2278
  %v2280 = vpop.f32.mrb[0].mxu0
  %2281 = vmatprep.mubr.f32.mxu0 0.0
  %2282 = vmatmul.mubr.f32.gmra.mrb[0].mxu0 %v2119
  %v2283 = vpop.f32.mrb[0].mxu0
  %v2284 = vadd.f32 %v2102, %v2283
  %v2285 = vpop.f32.mrb[0].mxu0
  %2286 = vmatprep.mubr.f32.mxu0 0.0
  %2287 = vmatmul.mubr.f32.gmra.mrb[0].mxu0 %v2122
  %v2288 = vpop.f32.mrb[0].mxu0
  %v2289 = vadd.f32 %v2107, %v2288
  %v2290 = vpop.f32.mrb[0].mxu0
  %2291 = vmatprep.mubr.f32.mxu0 0.0
  %2292 = vmatmul.mubr.f32.gmra.mrb[0].mxu0 %v2125
  %v2293 = vpop.f32.mrb[0].mxu0
  %v2294 = vadd.f32 %v2112, %v2293
  %v2295 = vpop.f32.mrb[0].mxu0
  %2296 = vdwg.mxu0
  %2297 = vset.pattern.permute.xlu0 32
  %2298 = vperm.xlu0 %2297, %v31
  %v2299 = vpop.permute.xlu0 %2298
  %2301 = vset.pattern.permute.xlu0 32
  %2302 = vperm.xlu0 %2301, %v32
  %v2303 = vpop.permute.xlu0 %2302
  %2305 = vset.pattern.permute.xlu0 32
  %2306 = vperm.xlu0 %2305, %v33
  %v2307 = vpop.permute.xlu0 %2306
  %2309 = vset.pattern.permute.xlu0 32
  %2310 = vperm.xlu0 %2309, %v34
  %v2311 = vpop.permute.xlu0 %2310
  %v2313 = vadd.f32 %v2194, %v2299
  %v2314 = vadd.f32 %v2199, %v2303
  %v2315 = vadd.f32 %v2204, %v2307
  %v2316 = vadd.f32 %v2209, %v2311
  %v2317 = vadd.f32 %v2279, %v2299
  %v2318 = vadd.f32 %v2284, %v2303
  %v2319 = vadd.f32 %v2289, %v2307
  %v2320 = vadd.f32 %v2294, %v2311
  %v2321 = vmax.f32 %v2313, 0.0
  %v2322 = vmax.f32 %v2314, 0.0
  %v2323 = vmax.f32 %v2315, 0.0
  %v2324 = vmax.f32 %v2316, 0.0
  %v2325 = vmax.f32 %v2317, 0.0
  %v2326 = vmax.f32 %v2318, 0.0
  %v2327 = vmax.f32 %v2319, 0.0
  %v2328 = vmax.f32 %v2320, 0.0
  %2329 = vst.msk [vmem:[%s6] sm:$0xff] %vm657, %v2321
  %2330 = vst.msk [vmem:[%s6 + $0x8] sm:$0xff] %vm657, %v2322
  %2331 = vst.msk [vmem:[%s6 + $0x10] sm:$0xff] %vm657, %v2323
  %2332 = vst.msk [vmem:[%s6 + $0x18] sm:$0xff] %vm657, %v2324
  %2333 = vst.msk [vmem:[%s6 + $0x20] sm:$0xff] %vm657, %v2325
  %2334 = vst.msk [vmem:[%s6 + $0x28] sm:$0xff] %vm657, %v2326
  %2335 = vst.msk [vmem:[%s6 + $0x30] sm:$0xff] %vm657, %v2327
  %2336 = vst.msk [vmem:[%s6 + $0x38] sm:$0xff] %vm657, %v2328
  // Predicated region
  $region26: #{gau_forward.1} parent=0 // pred_check
    _
  $region27: #{gau_forward.1} parent=0 // pred_check_branch
    %2338 = sbr.rel (0) target = $region29
  $region28: #{gau_forward.1} parent=0 // pred_region
    _
  $region29: #{gau_forward.1} parent=0 // pred_fallthru
    _
  // Predicated region
  $region30: #{gau_forward.1} parent=0 // pred_check
    _
  $region31: #{gau_forward.1} parent=0 // pred_check_branch
    %2340 = sbr.rel (0) target = $region33
  $region32: #{gau_forward.1} parent=0 // pred_region
    _
  $region33: #{gau_forward.1} parent=0 // pred_fallthru
    _

</llo_original>
